<compile_context>
chip_gen: v6e
topology: v6e:2x2x1
jax: 0.10.0
libtpu: 0.0.40
codegen_flags: <defaults>
</compile_context>

<pallas_src>
import jax
import jax.numpy as jnp
import numpy as np
from jax.experimental import pallas as pl
from jax.experimental.pallas import tpu as pltpu

NEG_SLOPE = 0.01
BN_EPS = 1e-5


def _round_up(n, m):
  return ((n + m - 1) // m) * m


# -----------------------------------------------------------------------------
# Host-built 0/1 selector constants (trace-time numpy; land in VMEM once)
# -----------------------------------------------------------------------------
def _pool_selector(tb, seg_in, seg_out, n_valid):
  """(tb*seg_out, tb*seg_in) block-diagonal matrix picking row 2r (r < n_valid) of
  each padded input segment; padded tail rows of the output are all-zero rows."""
  sel = np.zeros((tb * seg_out, tb * seg_in), np.float32)
  for b in range(tb):
    for r in range(n_valid):
      sel[b * seg_out + r, b * seg_in + 2 * r] = 1.0
  return jnp.asarray(sel)


def _row_selector(tb, seg):
  """(tb, tb*seg) matrix picking the first row of each padded batch segment."""
  sel = np.zeros((tb, tb * seg), np.float32)
  for b in range(tb):
    sel[b, b * seg] = 1.0
  return jnp.asarray(sel)


# -----------------------------------------------------------------------------
# Fused forward kernel: conv1..conv4 (+pool) + flatten + fc1 + fc2
# -----------------------------------------------------------------------------
def _fused_cnn_kernel(x1_ref, w1_ref, b1_ref, ps1_ref,
                      w2_ref, b2_ref, ps2_ref,
                      w3_ref, b3_ref,
                      w4_ref, b4_ref,
                      osel_ref, fw1_ref, fb1_ref, fw2_ref, fb2_ref,
                      o_ref):
  f32 = jnp.float32
  C1 = w1_ref.shape[1]
  C2 = w2_ref.shape[1]
  C3 = w3_ref.shape[1]
  C4 = w4_ref.shape[1]
  K2 = w2_ref.shape[0] // C1
  K3 = w3_ref.shape[0] // C2
  K4 = w4_ref.shape[0] // C3
  L4 = fw1_ref.shape[0] // C4

  def leaky(v):                       # LeakyReLU(0.01): slope < 1  =>  max(v, 0.01*v)
    return jnp.maximum(v, NEG_SLOPE * v)

  def shift_up(a, k):                 # result[r] = a[(r + k) % nrows]; one XLU rotation
    n = a.shape[0]
    return a if k == 0 else pltpu.roll(a, shift=n - k, axis=0)

  def conv_merged(x, w_ref, b_ref, k_taps):
    # Merged-K im2col: lane-concat the K rolled copies -> ONE full-depth MXU matmul.
    z = jnp.concatenate([shift_up(x, k) for k in range(k_taps)], axis=1)
    return jnp.dot(z, w_ref[...], preferred_element_type=f32) + b_ref[...]

  def maxpool2(a, sel_ref):
    # MaxPool1d(2): VPU max with a rolled copy, then one block-diagonal selector matmul
    # that picks even rows, re-packs to padded segments and zeroes padded tail rows.
    m = jnp.maximum(a, shift_up(a, 1))
    return jnp.dot(sel_ref[...], m, preferred_element_type=f32)

  # conv1 (wrapper-built im2col) -> LeakyReLU -> pool         [BN1 folded into conv2]
  a1 = leaky(jnp.dot(x1_ref[...], w1_ref[...], preferred_element_type=f32)
             + b1_ref[...])
  p1 = maxpool2(a1, ps1_ref)                                  # (TB*segp1, 64)

  # conv2 -> LeakyReLU -> pool                                [BN2 folded into conv3]
  a2 = leaky(conv_merged(p1, w2_ref, b2_ref, K2))             # (TB*segp1, 128)
  p2 = maxpool2(a2, ps2_ref)                                  # (TB*segp2, 128)

  # conv3 -> LeakyReLU                                        [BN3 folded into conv4]
  a3 = leaky(conv_merged(p2, w3_ref, b3_ref, K3))             # (TB*segp2, 96)

  # conv4 -> LeakyReLU                                        [BN4 folded into fc1]
  a4 = leaky(conv_merged(a3, w4_ref, b4_ref, K4))             # (TB*segp2, 64)

  # Flatten relayout (rolled lane-concat) -> row select -> fc1 -> fc2.
  z = jnp.concatenate([shift_up(a4, l) for l in range(L4)], axis=1)   # (TB*segp2, L4*C4)
  q = jnp.dot(osel_ref[...], z, preferred_element_type=f32)           # (TB, L4*C4)
  h = jnp.dot(q, fw1_ref[...], preferred_element_type=f32) + fb1_ref[...]
  out = jnp.dot(h, fw2_ref[...], preferred_element_type=f32) + fb2_ref[...]
  o_ref[...] = out.astype(o_ref.dtype)


# -----------------------------------------------------------------------------
# Wrapper
# -----------------------------------------------------------------------------
def protein_feature_cnn_forward(x_ncl, kp, *, batch_tile=None):
  """x_ncl: (B, vec_len_p, pro_coding_length) in PyTorch NCL layout.
  kp: kernel operands from fold_params() (BN affines already folded)."""
  B, C_in, L = x_ncl.shape
  w1, b1 = kp["w1"], kp["b1"]
  w2, b2 = kp["w2"], kp["b2"]
  w3, b3 = kp["w3"], kp["b3"]
  w4, b4 = kp["w4"], kp["b4"]
  fw1, fb1, fw2, fb2 = kp["fw1"], kp["fb1"], kp["fw2"], kp["fb2"]

  K1 = w1.shape[0] // C_in
  C1 = w1.shape[1]
  K2 = w2.shape[0] // C1
  C2 = w2.shape[1]
  K3 = w3.shape[0] // C2
  C3 = w3.shape[1]
  K4 = w4.shape[0] // C3
  C4 = w4.shape[1]
  OUT = fw2.shape[1]

  L1 = L - K1 + 1
  P1 = L1 // 2
  L2 = P1 - K2 + 1
  P2 = L2 // 2
  L3 = P2 - K3 + 1
  L4 = L3 - K4 + 1
  assert fw1.shape[0] == L4 * C4, (fw1.shape, L4, C4)

  # Sublane-aligned per-batch segment lengths.
  seg1 = _round_up(L1, 8)        # conv1-output slab
  segp1 = _round_up(P1, 8)       # pool1-output slab (conv2 input)
  segp2 = _round_up(P2, 8)       # pool2-output slab (conv3/conv4/fc input)

  TB = B if batch_tile is None else batch_tile   # batch tile (keep multiple of 8 if tiled)
  assert B % TB == 0, (B, TB)

  # --- conv1 im2col slab (one cheap fused XLA op; pad rows are zero) ---
  x_lc = jnp.transpose(x_ncl, (0, 2, 1)).astype(jnp.float32)          # (B, L, C_in)
  ic = jnp.concatenate([x_lc[:, k:k + L1, :] for k in range(K1)], axis=2)
  ic = jnp.pad(ic, ((0, 0), (0, seg1 - L1), (0, 0)))
  x1 = ic.reshape(B * seg1, K1 * C_in)                                # row = b*seg1 + l

  # --- host-built constant selectors (for one batch tile) ---
  ps1 = _pool_selector(TB, seg1, segp1, P1)
  ps2 = _pool_selector(TB, segp1, segp2, P2)
  osel = _row_selector(TB, segp2)

  const = lambda arr: pl.BlockSpec(arr.shape, lambda b: (0, 0))       # VMEM-resident
  grid_spec = pltpu.PrefetchScalarGridSpec(
      num_scalar_prefetch=0,
      grid=(B // TB,),
      in_specs=[
          pl.BlockSpec((TB * seg1, K1 * C_in), lambda b: (b, 0)),     # im2col slab
          const(w1), const(b1), const(ps1),
          const(w2), const(b2), const(ps2),
          const(w3), const(b3),
          const(w4), const(b4),
          const(osel), const(fw1), const(fb1), const(fw2), const(fb2),
      ],
      out_specs=pl.BlockSpec((TB, OUT), lambda b: (b, 0)),
  )
  return pl.pallas_call(
      _fused_cnn_kernel,
      out_shape=jax.ShapeDtypeStruct((B, OUT), jnp.float32),
      grid_spec=grid_spec,
      compiler_params=pltpu.CompilerParams(
          dimension_semantics=("parallel",)),
  )(x1, w1, b1, ps1, w2, b2, ps2, w3, b3, w4, b4, osel, fw1, fb1, fw2, fb2)


# -----------------------------------------------------------------------------
# Parameter construction + BN/layout folding
# -----------------------------------------------------------------------------
def init_params(key, vec_len_p, pro_coding_length):
  """Raw PyTorch-equivalent parameters (conv/fc weights + eval-mode BN scale/shift)."""
  layers = [(vec_len_p, 64, 7, True), (64, 128, 6, True),
            (128, 96, 5, False), (96, 64, 4, False)]
  cur = pro_coding_length
  for (_, _, k, pool) in layers:
    cur = cur - k + 1
    if pool:
      cur //= 2
  flat_dim = layers[-1][1] * cur

  params = {}
  keys = jax.random.split(key, 32)
  ki = 0
  for idx, (cin, cout, k, _) in enumerate(layers, start=1):
    bound = 1.0 / np.sqrt(cin * k)
    params[f"w{idx}"] = jax.random.uniform(keys[ki], (k, cin, cout), jnp.float32,
                                           -bound, bound); ki += 1
    params[f"b{idx}"] = jax.random.uniform(keys[ki], (cout,), jnp.float32,
                                           -bound, bound); ki += 1
    gamma = jax.random.uniform(keys[ki], (cout,), jnp.float32, 0.5, 1.5); ki += 1
    beta = jax.random.uniform(keys[ki], (cout,), jnp.float32, -0.1, 0.1); ki += 1
    rmean = jax.random.uniform(keys[ki], (cout,), jnp.float32, -0.1, 0.1); ki += 1
    rvar = jax.random.uniform(keys[ki], (cout,), jnp.float32, 0.5, 1.5); ki += 1
    scale = gamma / jnp.sqrt(rvar + BN_EPS)
    params[f"s{idx}"] = scale
    params[f"h{idx}"] = beta - rmean * scale
  b1 = 1.0 / np.sqrt(flat_dim)
  params["fw1"] = jax.random.uniform(keys[ki], (flat_dim, 128), jnp.float32, -b1, b1); ki += 1
  params["fb1"] = jax.random.uniform(keys[ki], (128,), jnp.float32, -b1, b1); ki += 1
  b2 = 1.0 / np.sqrt(128)
  params["fw2"] = jax.random.uniform(keys[ki], (128, 64), jnp.float32, -b2, b2); ki += 1
  params["fb2"] = jax.random.uniform(keys[ki], (64,), jnp.float32, -b2, b2); ki += 1
  return params


def fold_params(params):
  """Kernel operands: fold each eval-mode BN affine into the NEXT linear layer (exact),
  stack conv weights k-major for the merged-K im2col matmuls, and pre-permute fc1 rows
  to the kernel's (l, c) lane order."""
  kp = {}
  K1, C_in, C1 = params["w1"].shape
  kp["w1"] = params["w1"].reshape(K1 * C_in, C1)          # row = k*C_in + c
  kp["b1"] = params["b1"].reshape(1, -1)

  def fold_into_conv(w, b, s_prev, t_prev):
    K, Ci, Co = w.shape
    w_f = w * s_prev[None, :, None]                       # diag(s_prev) @ W_k
    b_f = b + jnp.einsum("i,kio->o", t_prev, w)
    return w_f.reshape(K * Ci, Co), b_f.reshape(1, -1)

  kp["w2"], kp["b2"] = fold_into_conv(params["w2"], params["b2"],
                                      params["s1"], params["h1"])
  kp["w3"], kp["b3"] = fold_into_conv(params["w3"], params["b3"],
                                      params["s2"], params["h2"])
  kp["w4"], kp["b4"] = fold_into_conv(params["w4"], params["b4"],
                                      params["s3"], params["h3"])

  C4 = params["w4"].shape[2]
  L4 = params["fw1"].shape[0] // C4
  fw1_cl = params["fw1"].reshape(C4, L4, -1)              # PyTorch flatten: row = c*L4 + l
  s4, t4 = params["s4"], params["h4"]
  kp["fw1"] = jnp.transpose(fw1_cl * s4[:, None, None], (1, 0, 2)).reshape(L4 * C4, -1)
  kp["fb1"] = (params["fb1"] + jnp.einsum("c,clo->o", t4, fw1_cl)).reshape(1, -1)
  kp["fw2"] = params["fw2"]
  kp["fb2"] = params["fb2"].reshape(1, -1)
  return kp


# -----------------------------------------------------------------------------
# Pure-JAX reference (PyTorch-order flatten; correctness check only)
# -----------------------------------------------------------------------------
def ref_forward(x_ncl, params):
  def conv(x, w, b):
    K = w.shape[0]
    L_out = x.shape[1] - K + 1
    acc = jnp.broadcast_to(b[None, None, :],
                           (x.shape[0], L_out, w.shape[2])).astype(jnp.float32)
    for k in range(K):
      acc = acc + jnp.einsum("bli,io->blo", x[:, k:k + L_out, :], w[k])
    return acc

  def leaky(v): return jnp.where(v >= 0, v, NEG_SLOPE * v)

  def pool(v):
    B, L, C = v.shape
    Lp = L // 2
    return v[:, :2 * Lp, :].reshape(B, Lp, 2, C).max(axis=2)

  def bn(v, s, h): return v * s[None, None, :] + h[None, None, :]

  x = jnp.transpose(x_ncl, (0, 2, 1)).astype(jnp.float32)
  x = bn(pool(leaky(conv(x, params["w1"], params["b1"]))), params["s1"], params["h1"])
  x = bn(pool(leaky(conv(x, params["w2"], params["b2"]))), params["s2"], params["h2"])
  x = bn(leaky(conv(x, params["w3"], params["b3"])), params["s3"], params["h3"])
  x = bn(leaky(conv(x, params["w4"], params["b4"])), params["s4"], params["h4"])
  B = x.shape[0]
  x = jnp.transpose(x, (0, 2, 1)).reshape(B, -1)      # PyTorch (B, C, L) flatten order
  x = x @ params["fw1"] + params["fb1"]
  x = x @ params["fw2"] + params["fb2"]
  return x


if __name__ == "__main__":
  B = 2
  vec_len_p = 4            # vector_repeatition_cnn
  pro_coding_length = 64   # smallest "nice" length that survives the conv/pool stack

  key = jax.random.PRNGKey(0)
  k_params, k_x = jax.random.split(key)
  params = init_params(k_params, vec_len_p, pro_coding_length)
  kp = fold_params(params)
  x = jax.random.normal(k_x, (B, vec_len_p, pro_coding_length), jnp.float32)

  fwd = jax.jit(protein_feature_cnn_forward)
  out = jax.block_until_ready(fwd(x, kp))

  ref = jax.block_until_ready(ref_forward(x, params))
  assert out.shape == (B, 64), out.shape
  assert np.allclose(np.asarray(out), np.asarray(ref), atol=2e-3, rtol=2e-3), \
      np.max(np.abs(np.asarray(out) - np.asarray(ref)))

  print("KERNEL_OK")
</pallas_src>

<mosaic_0001>
module attributes {stable_mosaic.version = 11 : i64} {
  func.func @_fused_cnn_kernel(%arg0: i32, %arg1: memref<128x28xf32, #tpu.memory_space<vmem>>, %arg2: memref<28x64xf32, #tpu.memory_space<vmem>>, %arg3: memref<1x64xf32, #tpu.memory_space<vmem>>, %arg4: memref<64x128xf32, #tpu.memory_space<vmem>>, %arg5: memref<384x128xf32, #tpu.memory_space<vmem>>, %arg6: memref<1x128xf32, #tpu.memory_space<vmem>>, %arg7: memref<32x64xf32, #tpu.memory_space<vmem>>, %arg8: memref<640x96xf32, #tpu.memory_space<vmem>>, %arg9: memref<1x96xf32, #tpu.memory_space<vmem>>, %arg10: memref<384x64xf32, #tpu.memory_space<vmem>>, %arg11: memref<1x64xf32, #tpu.memory_space<vmem>>, %arg12: memref<2x32xf32, #tpu.memory_space<vmem>>, %arg13: memref<320x128xf32, #tpu.memory_space<vmem>>, %arg14: memref<1x128xf32, #tpu.memory_space<vmem>>, %arg15: memref<128x64xf32, #tpu.memory_space<vmem>>, %arg16: memref<1x64xf32, #tpu.memory_space<vmem>>, %arg17: memref<2x64xf32, #tpu.memory_space<vmem>>) attributes {dimension_semantics = [#tpu.dimension_semantics<parallel>], iteration_bounds = array<i64: 1>, scalar_prefetch = 0 : i64, scratch_operands = 0 : i64, tpu.core_type = #tpu.core_type<tc>, window_params = [{transform_indices = @transform_0, window_bounds = array<i64: 128, 28>}, {pipeline_mode = #tpu.pipeline_mode<synchronous>, transform_indices = @transform_1, window_bounds = array<i64: 28, 64>}, {pipeline_mode = #tpu.pipeline_mode<synchronous>, transform_indices = @transform_2, window_bounds = array<i64: 1, 64>}, {pipeline_mode = #tpu.pipeline_mode<synchronous>, transform_indices = @transform_3, window_bounds = array<i64: 64, 128>}, {pipeline_mode = #tpu.pipeline_mode<synchronous>, transform_indices = @transform_4, window_bounds = array<i64: 384, 128>}, {pipeline_mode = #tpu.pipeline_mode<synchronous>, transform_indices = @transform_5, window_bounds = array<i64: 1, 128>}, {pipeline_mode = #tpu.pipeline_mode<synchronous>, transform_indices = @transform_6, window_bounds = array<i64: 32, 64>}, {pipeline_mode = #tpu.pipeline_mode<synchronous>, transform_indices = @transform_7, window_bounds = array<i64: 640, 96>}, {pipeline_mode = #tpu.pipeline_mode<synchronous>, transform_indices = @transform_8, window_bounds = array<i64: 1, 96>}, {pipeline_mode = #tpu.pipeline_mode<synchronous>, transform_indices = @transform_9, window_bounds = array<i64: 384, 64>}, {pipeline_mode = #tpu.pipeline_mode<synchronous>, transform_indices = @transform_10, window_bounds = array<i64: 1, 64>}, {pipeline_mode = #tpu.pipeline_mode<synchronous>, transform_indices = @transform_11, window_bounds = array<i64: 2, 32>}, {pipeline_mode = #tpu.pipeline_mode<synchronous>, transform_indices = @transform_12, window_bounds = array<i64: 320, 128>}, {pipeline_mode = #tpu.pipeline_mode<synchronous>, transform_indices = @transform_13, window_bounds = array<i64: 1, 128>}, {pipeline_mode = #tpu.pipeline_mode<synchronous>, transform_indices = @transform_14, window_bounds = array<i64: 128, 64>}, {pipeline_mode = #tpu.pipeline_mode<synchronous>, transform_indices = @transform_15, window_bounds = array<i64: 1, 64>}, {transform_indices = @transform_16, window_bounds = array<i64: 2, 64>}]} {
    %c0 = arith.constant 0 : index
    %c0_0 = arith.constant 0 : index
    %0 = vector.load %arg1[%c0, %c0_0] : memref<128x28xf32, #tpu.memory_space<vmem>>, vector<128x28xf32>
    %c0_1 = arith.constant 0 : index
    %c0_2 = arith.constant 0 : index
    %1 = vector.load %arg2[%c0_1, %c0_2] : memref<28x64xf32, #tpu.memory_space<vmem>>, vector<28x64xf32>
    %cst = arith.constant dense<0.000000e+00> : vector<128x64xf32>
    %2 = tpu.matmul %0, %1, %cst {dimension_numbers = #tpu.dot_dimension_numbers<[1], [0], [0], [1], [0, 0, 1, 1], [], []>} : vector<128x28xf32>, vector<28x64xf32>, vector<128x64xf32> -> vector<128x64xf32>
    %c0_3 = arith.constant 0 : index
    %c0_4 = arith.constant 0 : index
    %3 = vector.load %arg3[%c0_3, %c0_4] : memref<1x64xf32, #tpu.memory_space<vmem>>, vector<1x64xf32>
    %4 = vector.broadcast %3 : vector<1x64xf32> to vector<128x64xf32>
    %5 = arith.addf %2, %4 : vector<128x64xf32>
    %cst_5 = arith.constant 0.00999999977 : f32
    %6 = vector.broadcast %cst_5 : f32 to vector<128x64xf32>
    %7 = arith.mulf %6, %5 : vector<128x64xf32>
    %8 = arith.maximumf %5, %7 : vector<128x64xf32>
    %c127_i32 = arith.constant 127 : i32
    %9 = tpu.dynamic_rotate %8 by %c127_i32 dim 0 : vector<128x64xf32>, i32 -> vector<128x64xf32>
    %10 = arith.maximumf %8, %9 : vector<128x64xf32>
    %c0_6 = arith.constant 0 : index
    %c0_7 = arith.constant 0 : index
    %11 = vector.load %arg4[%c0_6, %c0_7] : memref<64x128xf32, #tpu.memory_space<vmem>>, vector<64x128xf32>
    %cst_8 = arith.constant dense<0.000000e+00> : vector<64x64xf32>
    %12 = tpu.matmul %11, %10, %cst_8 {dimension_numbers = #tpu.dot_dimension_numbers<[1], [0], [0], [1], [0, 0, 1, 1], [], []>} : vector<64x128xf32>, vector<128x64xf32>, vector<64x64xf32> -> vector<64x64xf32>
    %c63_i32 = arith.constant 63 : i32
    %13 = tpu.dynamic_rotate %12 by %c63_i32 dim 0 : vector<64x64xf32>, i32 -> vector<64x64xf32>
    %c62_i32 = arith.constant 62 : i32
    %14 = tpu.dynamic_rotate %12 by %c62_i32 dim 0 : vector<64x64xf32>, i32 -> vector<64x64xf32>
    %c61_i32 = arith.constant 61 : i32
    %15 = tpu.dynamic_rotate %12 by %c61_i32 dim 0 : vector<64x64xf32>, i32 -> vector<64x64xf32>
    %c60_i32 = arith.constant 60 : i32
    %16 = tpu.dynamic_rotate %12 by %c60_i32 dim 0 : vector<64x64xf32>, i32 -> vector<64x64xf32>
    %c59_i32 = arith.constant 59 : i32
    %17 = tpu.dynamic_rotate %12 by %c59_i32 dim 0 : vector<64x64xf32>, i32 -> vector<64x64xf32>
    %18 = tpu.concatenate %12, %13, %14, %15, %16, %17 in 1 : vector<64x64xf32>, vector<64x64xf32>, vector<64x64xf32>, vector<64x64xf32>, vector<64x64xf32>, vector<64x64xf32> -> vector<64x384xf32>
    %c0_9 = arith.constant 0 : index
    %c0_10 = arith.constant 0 : index
    %19 = vector.load %arg5[%c0_9, %c0_10] : memref<384x128xf32, #tpu.memory_space<vmem>>, vector<384x128xf32>
    %cst_11 = arith.constant dense<0.000000e+00> : vector<64x128xf32>
    %20 = tpu.matmul %18, %19, %cst_11 {dimension_numbers = #tpu.dot_dimension_numbers<[1], [0], [0], [1], [0, 0, 1, 1], [], []>} : vector<64x384xf32>, vector<384x128xf32>, vector<64x128xf32> -> vector<64x128xf32>
    %c0_12 = arith.constant 0 : index
    %c0_13 = arith.constant 0 : index
    %21 = vector.load %arg6[%c0_12, %c0_13] : memref<1x128xf32, #tpu.memory_space<vmem>>, vector<1x128xf32>
    %22 = vector.broadcast %21 : vector<1x128xf32> to vector<64x128xf32>
    %23 = arith.addf %20, %22 : vector<64x128xf32>
    %cst_14 = arith.constant 0.00999999977 : f32
    %24 = vector.broadcast %cst_14 : f32 to vector<64x128xf32>
    %25 = arith.mulf %24, %23 : vector<64x128xf32>
    %26 = arith.maximumf %23, %25 : vector<64x128xf32>
    %c63_i32_15 = arith.constant 63 : i32
    %27 = tpu.dynamic_rotate %26 by %c63_i32_15 dim 0 : vector<64x128xf32>, i32 -> vector<64x128xf32>
    %28 = arith.maximumf %26, %27 : vector<64x128xf32>
    %c0_16 = arith.constant 0 : index
    %c0_17 = arith.constant 0 : index
    %29 = vector.load %arg7[%c0_16, %c0_17] : memref<32x64xf32, #tpu.memory_space<vmem>>, vector<32x64xf32>
    %cst_18 = arith.constant dense<0.000000e+00> : vector<32x128xf32>
    %30 = tpu.matmul %29, %28, %cst_18 {dimension_numbers = #tpu.dot_dimension_numbers<[1], [0], [0], [1], [0, 0, 1, 1], [], []>} : vector<32x64xf32>, vector<64x128xf32>, vector<32x128xf32> -> vector<32x128xf32>
    %c31_i32 = arith.constant 31 : i32
    %31 = tpu.dynamic_rotate %30 by %c31_i32 dim 0 : vector<32x128xf32>, i32 -> vector<32x128xf32>
    %c30_i32 = arith.constant 30 : i32
    %32 = tpu.dynamic_rotate %30 by %c30_i32 dim 0 : vector<32x128xf32>, i32 -> vector<32x128xf32>
    %c29_i32 = arith.constant 29 : i32
    %33 = tpu.dynamic_rotate %30 by %c29_i32 dim 0 : vector<32x128xf32>, i32 -> vector<32x128xf32>
    %c28_i32 = arith.constant 28 : i32
    %34 = tpu.dynamic_rotate %30 by %c28_i32 dim 0 : vector<32x128xf32>, i32 -> vector<32x128xf32>
    %35 = tpu.concatenate %30, %31, %32, %33, %34 in 1 : vector<32x128xf32>, vector<32x128xf32>, vector<32x128xf32>, vector<32x128xf32>, vector<32x128xf32> -> vector<32x640xf32>
    %c0_19 = arith.constant 0 : index
    %c0_20 = arith.constant 0 : index
    %36 = vector.load %arg8[%c0_19, %c0_20] : memref<640x96xf32, #tpu.memory_space<vmem>>, vector<640x96xf32>
    %cst_21 = arith.constant dense<0.000000e+00> : vector<32x96xf32>
    %37 = tpu.matmul %35, %36, %cst_21 {dimension_numbers = #tpu.dot_dimension_numbers<[1], [0], [0], [1], [0, 0, 1, 1], [], []>} : vector<32x640xf32>, vector<640x96xf32>, vector<32x96xf32> -> vector<32x96xf32>
    %c0_22 = arith.constant 0 : index
    %c0_23 = arith.constant 0 : index
    %38 = vector.load %arg9[%c0_22, %c0_23] : memref<1x96xf32, #tpu.memory_space<vmem>>, vector<1x96xf32>
    %39 = vector.broadcast %38 : vector<1x96xf32> to vector<32x96xf32>
    %40 = arith.addf %37, %39 : vector<32x96xf32>
    %cst_24 = arith.constant 0.00999999977 : f32
    %41 = vector.broadcast %cst_24 : f32 to vector<32x96xf32>
    %42 = arith.mulf %41, %40 : vector<32x96xf32>
    %43 = arith.maximumf %40, %42 : vector<32x96xf32>
    %c31_i32_25 = arith.constant 31 : i32
    %44 = tpu.dynamic_rotate %43 by %c31_i32_25 dim 0 : vector<32x96xf32>, i32 -> vector<32x96xf32>
    %c30_i32_26 = arith.constant 30 : i32
    %45 = tpu.dynamic_rotate %43 by %c30_i32_26 dim 0 : vector<32x96xf32>, i32 -> vector<32x96xf32>
    %c29_i32_27 = arith.constant 29 : i32
    %46 = tpu.dynamic_rotate %43 by %c29_i32_27 dim 0 : vector<32x96xf32>, i32 -> vector<32x96xf32>
    %47 = tpu.concatenate %43, %44, %45, %46 in 1 : vector<32x96xf32>, vector<32x96xf32>, vector<32x96xf32>, vector<32x96xf32> -> vector<32x384xf32>
    %c0_28 = arith.constant 0 : index
    %c0_29 = arith.constant 0 : index
    %48 = vector.load %arg10[%c0_28, %c0_29] : memref<384x64xf32, #tpu.memory_space<vmem>>, vector<384x64xf32>
    %cst_30 = arith.constant dense<0.000000e+00> : vector<32x64xf32>
    %49 = tpu.matmul %47, %48, %cst_30 {dimension_numbers = #tpu.dot_dimension_numbers<[1], [0], [0], [1], [0, 0, 1, 1], [], []>} : vector<32x384xf32>, vector<384x64xf32>, vector<32x64xf32> -> vector<32x64xf32>
    %c0_31 = arith.constant 0 : index
    %c0_32 = arith.constant 0 : index
    %50 = vector.load %arg11[%c0_31, %c0_32] : memref<1x64xf32, #tpu.memory_space<vmem>>, vector<1x64xf32>
    %51 = vector.broadcast %50 : vector<1x64xf32> to vector<32x64xf32>
    %52 = arith.addf %49, %51 : vector<32x64xf32>
    %cst_33 = arith.constant 0.00999999977 : f32
    %53 = vector.broadcast %cst_33 : f32 to vector<32x64xf32>
    %54 = arith.mulf %53, %52 : vector<32x64xf32>
    %55 = arith.maximumf %52, %54 : vector<32x64xf32>
    %c31_i32_34 = arith.constant 31 : i32
    %56 = tpu.dynamic_rotate %55 by %c31_i32_34 dim 0 : vector<32x64xf32>, i32 -> vector<32x64xf32>
    %c30_i32_35 = arith.constant 30 : i32
    %57 = tpu.dynamic_rotate %55 by %c30_i32_35 dim 0 : vector<32x64xf32>, i32 -> vector<32x64xf32>
    %c29_i32_36 = arith.constant 29 : i32
    %58 = tpu.dynamic_rotate %55 by %c29_i32_36 dim 0 : vector<32x64xf32>, i32 -> vector<32x64xf32>
    %c28_i32_37 = arith.constant 28 : i32
    %59 = tpu.dynamic_rotate %55 by %c28_i32_37 dim 0 : vector<32x64xf32>, i32 -> vector<32x64xf32>
    %60 = tpu.concatenate %55, %56, %57, %58, %59 in 1 : vector<32x64xf32>, vector<32x64xf32>, vector<32x64xf32>, vector<32x64xf32>, vector<32x64xf32> -> vector<32x320xf32>
    %c0_38 = arith.constant 0 : index
    %c0_39 = arith.constant 0 : index
    %61 = vector.load %arg12[%c0_38, %c0_39] : memref<2x32xf32, #tpu.memory_space<vmem>>, vector<2x32xf32>
    %cst_40 = arith.constant dense<0.000000e+00> : vector<2x320xf32>
    %62 = tpu.matmul %61, %60, %cst_40 {dimension_numbers = #tpu.dot_dimension_numbers<[1], [0], [0], [1], [0, 0, 1, 1], [], []>} : vector<2x32xf32>, vector<32x320xf32>, vector<2x320xf32> -> vector<2x320xf32>
    %c0_41 = arith.constant 0 : index
    %c0_42 = arith.constant 0 : index
    %63 = vector.load %arg13[%c0_41, %c0_42] : memref<320x128xf32, #tpu.memory_space<vmem>>, vector<320x128xf32>
    %cst_43 = arith.constant dense<0.000000e+00> : vector<2x128xf32>
    %64 = tpu.matmul %62, %63, %cst_43 {dimension_numbers = #tpu.dot_dimension_numbers<[1], [0], [0], [1], [0, 0, 1, 1], [], []>} : vector<2x320xf32>, vector<320x128xf32>, vector<2x128xf32> -> vector<2x128xf32>
    %c0_44 = arith.constant 0 : index
    %c0_45 = arith.constant 0 : index
    %65 = vector.load %arg14[%c0_44, %c0_45] : memref<1x128xf32, #tpu.memory_space<vmem>>, vector<1x128xf32>
    %66 = vector.broadcast %65 : vector<1x128xf32> to vector<2x128xf32>
    %67 = arith.addf %64, %66 : vector<2x128xf32>
    %c0_46 = arith.constant 0 : index
    %c0_47 = arith.constant 0 : index
    %68 = vector.load %arg15[%c0_46, %c0_47] : memref<128x64xf32, #tpu.memory_space<vmem>>, vector<128x64xf32>
    %cst_48 = arith.constant dense<0.000000e+00> : vector<2x64xf32>
    %69 = tpu.matmul %67, %68, %cst_48 {dimension_numbers = #tpu.dot_dimension_numbers<[1], [0], [0], [1], [0, 0, 1, 1], [], []>} : vector<2x128xf32>, vector<128x64xf32>, vector<2x64xf32> -> vector<2x64xf32>
    %c0_49 = arith.constant 0 : index
    %c0_50 = arith.constant 0 : index
    %70 = vector.load %arg16[%c0_49, %c0_50] : memref<1x64xf32, #tpu.memory_space<vmem>>, vector<1x64xf32>
    %71 = vector.broadcast %70 : vector<1x64xf32> to vector<2x64xf32>
    %72 = arith.addf %69, %71 : vector<2x64xf32>
    %c0_51 = arith.constant 0 : index
    %c0_52 = arith.constant 0 : index
    %73 = vector.load %arg17[%c0_51, %c0_52] : memref<2x64xf32, #tpu.memory_space<vmem>>, vector<2x64xf32>
    tpu.vector_store %arg17[%c0_51, %c0_52], %72 {strides = array<i32>} : memref<2x64xf32, #tpu.memory_space<vmem>>, vector<2x64xf32>,
    return
  }
  func.func @transform_0(%arg0: i32) -> (i32, i32) {
    %c0_i32 = arith.constant 0 : i32
    %c0_i32_0 = arith.constant 0 : i32
    return %arg0, %c0_i32 : i32, i32
  }
  func.func @transform_1(%arg0: i32) -> (i32, i32) {
    %c0_i32 = arith.constant 0 : i32
    %c0_i32_0 = arith.constant 0 : i32
    %c0_i32_1 = arith.constant 0 : i32
    return %c0_i32, %c0_i32_0 : i32, i32
  }
  func.func @transform_2(%arg0: i32) -> (i32, i32) {
    %c0_i32 = arith.constant 0 : i32
    %c0_i32_0 = arith.constant 0 : i32
    %c0_i32_1 = arith.constant 0 : i32
    return %c0_i32, %c0_i32_0 : i32, i32
  }
  func.func @transform_3(%arg0: i32) -> (i32, i32) {
    %c0_i32 = arith.constant 0 : i32
    %c0_i32_0 = arith.constant 0 : i32
    %c0_i32_1 = arith.constant 0 : i32
    return %c0_i32, %c0_i32_0 : i32, i32
  }
  func.func @transform_4(%arg0: i32) -> (i32, i32) {
    %c0_i32 = arith.constant 0 : i32
    %c0_i32_0 = arith.constant 0 : i32
    %c0_i32_1 = arith.constant 0 : i32
    return %c0_i32, %c0_i32_0 : i32, i32
  }
  func.func @transform_5(%arg0: i32) -> (i32, i32) {
    %c0_i32 = arith.constant 0 : i32
    %c0_i32_0 = arith.constant 0 : i32
    %c0_i32_1 = arith.constant 0 : i32
    return %c0_i32, %c0_i32_0 : i32, i32
  }
  func.func @transform_6(%arg0: i32) -> (i32, i32) {
    %c0_i32 = arith.constant 0 : i32
    %c0_i32_0 = arith.constant 0 : i32
    %c0_i32_1 = arith.constant 0 : i32
    return %c0_i32, %c0_i32_0 : i32, i32
  }
  func.func @transform_7(%arg0: i32) -> (i32, i32) {
    %c0_i32 = arith.constant 0 : i32
    %c0_i32_0 = arith.constant 0 : i32
    %c0_i32_1 = arith.constant 0 : i32
    return %c0_i32, %c0_i32_0 : i32, i32
  }
  func.func @transform_8(%arg0: i32) -> (i32, i32) {
    %c0_i32 = arith.constant 0 : i32
    %c0_i32_0 = arith.constant 0 : i32
    %c0_i32_1 = arith.constant 0 : i32
    return %c0_i32, %c0_i32_0 : i32, i32
  }
  func.func @transform_9(%arg0: i32) -> (i32, i32) {
    %c0_i32 = arith.constant 0 : i32
    %c0_i32_0 = arith.constant 0 : i32
    %c0_i32_1 = arith.constant 0 : i32
    return %c0_i32, %c0_i32_0 : i32, i32
  }
  func.func @transform_10(%arg0: i32) -> (i32, i32) {
    %c0_i32 = arith.constant 0 : i32
    %c0_i32_0 = arith.constant 0 : i32
    %c0_i32_1 = arith.constant 0 : i32
    return %c0_i32, %c0_i32_0 : i32, i32
  }
  func.func @transform_11(%arg0: i32) -> (i32, i32) {
    %c0_i32 = arith.constant 0 : i32
    %c0_i32_0 = arith.constant 0 : i32
    %c0_i32_1 = arith.constant 0 : i32
    return %c0_i32, %c0_i32_0 : i32, i32
  }
  func.func @transform_12(%arg0: i32) -> (i32, i32) {
    %c0_i32 = arith.constant 0 : i32
    %c0_i32_0 = arith.constant 0 : i32
    %c0_i32_1 = arith.constant 0 : i32
    return %c0_i32, %c0_i32_0 : i32, i32
  }
  func.func @transform_13(%arg0: i32) -> (i32, i32) {
    %c0_i32 = arith.constant 0 : i32
    %c0_i32_0 = arith.constant 0 : i32
    %c0_i32_1 = arith.constant 0 : i32
    return %c0_i32, %c0_i32_0 : i32, i32
  }
  func.func @transform_14(%arg0: i32) -> (i32, i32) {
    %c0_i32 = arith.constant 0 : i32
    %c0_i32_0 = arith.constant 0 : i32
    %c0_i32_1 = arith.constant 0 : i32
    return %c0_i32, %c0_i32_0 : i32, i32
  }
  func.func @transform_15(%arg0: i32) -> (i32, i32) {
    %c0_i32 = arith.constant 0 : i32
    %c0_i32_0 = arith.constant 0 : i32
    %c0_i32_1 = arith.constant 0 : i32
    return %c0_i32, %c0_i32_0 : i32, i32
  }
  func.func @transform_16(%arg0: i32) -> (i32, i32) {
    %c0_i32 = arith.constant 0 : i32
    %c0_i32_0 = arith.constant 0 : i32
    return %arg0, %c0_i32 : i32, i32
  }
}

</mosaic_0001>

<llo_original>
// kernel: protein_feature_cnn_forward.1
$region0: #{protein_feature_cnn_forward.1}
  #allocation0 [shape = 'u32[]', space=smem, size = 0x4, offset = 0x4, fixed_abs, tag = 'smem constant byte address 0x4 - core index']
  #allocation1 [shape = 'u32[144,128]{1,0:T(1,128)}', space=vmem, size = 0x12000, scoped, tag = 'internal scratch']
  %s0 = inlined_call_operand.vmem [shape: f32[128,28], index: 0, kind: input, shape index: {}]
  %s1 = inlined_call_operand.vmem [shape: f32[28,64], index: 1, kind: input, shape index: {}]
  %s2 = inlined_call_operand.vmem [shape: f32[1,64], index: 2, kind: input, shape index: {}]
  %s3 = inlined_call_operand.vmem [shape: f32[64,128], index: 3, kind: input, shape index: {}]
  %s4 = inlined_call_operand.vmem [shape: f32[384,128], index: 4, kind: input, shape index: {}]
  %s5 = inlined_call_operand.vmem [shape: f32[1,128], index: 5, kind: input, shape index: {}]
  %s6 = inlined_call_operand.vmem [shape: f32[32,64], index: 6, kind: input, shape index: {}]
  %s7 = inlined_call_operand.vmem [shape: f32[640,96], index: 7, kind: input, shape index: {}]
  %s8 = inlined_call_operand.vmem [shape: f32[1,96], index: 8, kind: input, shape index: {}]
  %s9 = inlined_call_operand.vmem [shape: f32[384,64], index: 9, kind: input, shape index: {}]
  %s10 = inlined_call_operand.vmem [shape: f32[1,64], index: 10, kind: input, shape index: {}]
  %s11 = inlined_call_operand.vmem [shape: f32[2,32], index: 11, kind: input, shape index: {}]
  %s12 = inlined_call_operand.vmem [shape: f32[320,128], index: 12, kind: input, shape index: {}]
  %s13 = inlined_call_operand.vmem [shape: f32[1,128], index: 13, kind: input, shape index: {}]
  %s14 = inlined_call_operand.vmem [shape: f32[128,64], index: 14, kind: input, shape index: {}]
  %s15 = inlined_call_operand.vmem [shape: f32[1,64], index: 15, kind: input, shape index: {}]
  %s16 = inlined_call_operand.hbm [shape: f32[2,64], index: 16, kind: output, shape index: {}]
  %s17 = sld [smem:[#allocation0]]
  $region74: #{protein_feature_cnn_forward.1} parent=0
    _
  %s19 = ssub.s32 1, %s17
  %s20 = scalar_select 0, %s19, %s17
  $region1: #{protein_feature_cnn_forward.1} parent=0
    #allocation2 [shape = 'u8[1024]{0}', space=vmem, size = 0x400, scoped, tag = 'output window, operand 0, single buffered']
    #allocation3 [shape = 's32[1]{0}', space=sflag, size = 0x4, scoped, tag = 'scoped memory for protein_feature_cnn_forward.1']
    %21 = vsyncpa [#allocation3], 0
    // Predicated region
    $region2: #{protein_feature_cnn_forward.1} parent=1 // pred_check
      _
    $region3: #{protein_feature_cnn_forward.1} parent=1 // pred_check_branch
      %23 = sbr.rel (0) target = $region5
    $region4: #{protein_feature_cnn_forward.1} parent=1 // pred_region
      _
    $region5: #{protein_feature_cnn_forward.1} parent=1 // pred_fallthru
      _
    // Predicated region
    $region6: #{protein_feature_cnn_forward.1} parent=1 // pred_check
      _
    $region7: #{protein_feature_cnn_forward.1} parent=1 // pred_check_branch
      %25 = sbr.rel (0) target = $region9
    $region8: #{protein_feature_cnn_forward.1} parent=1 // pred_region
      _
    $region9: #{protein_feature_cnn_forward.1} parent=1 // pred_fallthru
      _
    // Predicated region
    $region10: #{protein_feature_cnn_forward.1} parent=1 // pred_check
      _
    $region11: #{protein_feature_cnn_forward.1} parent=1 // pred_check_branch
      %27 = sbr.rel (0) target = $region13
    $region12: #{protein_feature_cnn_forward.1} parent=1 // pred_region
      _
    $region13: #{protein_feature_cnn_forward.1} parent=1 // pred_fallthru
      _
    // Predicated region
    $region14: #{protein_feature_cnn_forward.1} parent=1 // pred_check
      _
    $region15: #{protein_feature_cnn_forward.1} parent=1 // pred_check_branch
      %29 = sbr.rel (0) target = $region17
    $region16: #{protein_feature_cnn_forward.1} parent=1 // pred_region
      _
    $region17: #{protein_feature_cnn_forward.1} parent=1 // pred_fallthru
      _
    // Predicated region
    $region18: #{protein_feature_cnn_forward.1} parent=1 // pred_check
      _
    $region19: #{protein_feature_cnn_forward.1} parent=1 // pred_check_branch
      %31 = sbr.rel (0) target = $region21
    $region20: #{protein_feature_cnn_forward.1} parent=1 // pred_region
      _
    $region21: #{protein_feature_cnn_forward.1} parent=1 // pred_fallthru
      _
    // Predicated region
    $region22: #{protein_feature_cnn_forward.1} parent=1 // pred_check
      _
    $region23: #{protein_feature_cnn_forward.1} parent=1 // pred_check_branch
      %33 = sbr.rel (0) target = $region25
    $region24: #{protein_feature_cnn_forward.1} parent=1 // pred_region
      _
    $region25: #{protein_feature_cnn_forward.1} parent=1 // pred_fallthru
      _
    // Predicated region
    $region26: #{protein_feature_cnn_forward.1} parent=1 // pred_check
      _
    $region27: #{protein_feature_cnn_forward.1} parent=1 // pred_check_branch
      %35 = sbr.rel (0) target = $region29
    $region28: #{protein_feature_cnn_forward.1} parent=1 // pred_region
      _
    $region29: #{protein_feature_cnn_forward.1} parent=1 // pred_fallthru
      _
    // Predicated region
    $region30: #{protein_feature_cnn_forward.1} parent=1 // pred_check
      _
    $region31: #{protein_feature_cnn_forward.1} parent=1 // pred_check_branch
      %37 = sbr.rel (0) target = $region33
    $region32: #{protein_feature_cnn_forward.1} parent=1 // pred_region
      _
    $region33: #{protein_feature_cnn_forward.1} parent=1 // pred_fallthru
      _
    // Predicated region
    $region34: #{protein_feature_cnn_forward.1} parent=1 // pred_check
      _
    $region35: #{protein_feature_cnn_forward.1} parent=1 // pred_check_branch
      %39 = sbr.rel (0) target = $region37
    $region36: #{protein_feature_cnn_forward.1} parent=1 // pred_region
      _
    $region37: #{protein_feature_cnn_forward.1} parent=1 // pred_fallthru
      _
    // Predicated region
    $region38: #{protein_feature_cnn_forward.1} parent=1 // pred_check
      _
    $region39: #{protein_feature_cnn_forward.1} parent=1 // pred_check_branch
      %41 = sbr.rel (0) target = $region41
    $region40: #{protein_feature_cnn_forward.1} parent=1 // pred_region
      _
    $region41: #{protein_feature_cnn_forward.1} parent=1 // pred_fallthru
      _
    // Predicated region
    $region42: #{protein_feature_cnn_forward.1} parent=1 // pred_check
      _
    $region43: #{protein_feature_cnn_forward.1} parent=1 // pred_check_branch
      %43 = sbr.rel (0) target = $region45
    $region44: #{protein_feature_cnn_forward.1} parent=1 // pred_region
      _
    $region45: #{protein_feature_cnn_forward.1} parent=1 // pred_fallthru
      _
    // Predicated region
    $region46: #{protein_feature_cnn_forward.1} parent=1 // pred_check
      _
    $region47: #{protein_feature_cnn_forward.1} parent=1 // pred_check_branch
      %45 = sbr.rel (0) target = $region49
    $region48: #{protein_feature_cnn_forward.1} parent=1 // pred_region
      _
    $region49: #{protein_feature_cnn_forward.1} parent=1 // pred_fallthru
      _
    // Predicated region
    $region50: #{protein_feature_cnn_forward.1} parent=1 // pred_check
      _
    $region51: #{protein_feature_cnn_forward.1} parent=1 // pred_check_branch
      %47 = sbr.rel (0) target = $region53
    $region52: #{protein_feature_cnn_forward.1} parent=1 // pred_region
      _
    $region53: #{protein_feature_cnn_forward.1} parent=1 // pred_fallthru
      _
    // Predicated region
    $region54: #{protein_feature_cnn_forward.1} parent=1 // pred_check
      _
    $region55: #{protein_feature_cnn_forward.1} parent=1 // pred_check_branch
      %49 = sbr.rel (0) target = $region57
    $region56: #{protein_feature_cnn_forward.1} parent=1 // pred_region
      _
    $region57: #{protein_feature_cnn_forward.1} parent=1 // pred_fallthru
      _
    // Predicated region
    $region58: #{protein_feature_cnn_forward.1} parent=1 // pred_check
      _
    $region59: #{protein_feature_cnn_forward.1} parent=1 // pred_check_branch
      %51 = sbr.rel (0) target = $region61
    $region60: #{protein_feature_cnn_forward.1} parent=1 // pred_region
      _
    $region61: #{protein_feature_cnn_forward.1} parent=1 // pred_fallthru
      _
    // Predicated region
    $region62: #{protein_feature_cnn_forward.1} parent=1 // pred_check
      _
    $region63: #{protein_feature_cnn_forward.1} parent=1 // pred_check_branch
      %53 = sbr.rel (0) target = $region65
    $region64: #{protein_feature_cnn_forward.1} parent=1 // pred_region
      _
    $region65: #{protein_feature_cnn_forward.1} parent=1 // pred_fallthru
      _
    %v54 = vld [vmem:[%s0] sm:$0xff]
    %v55 = vld [vmem:[%s0 + $0x8] sm:$0xff]
    %v56 = vld [vmem:[%s0 + $0x10] sm:$0xff]
    %v57 = vld [vmem:[%s0 + $0x18] sm:$0xff]
    %v58 = vld [vmem:[%s0 + $0x20] sm:$0xff]
    %v59 = vld [vmem:[%s0 + $0x28] sm:$0xff]
    %v60 = vld [vmem:[%s0 + $0x30] sm:$0xff]
    %v61 = vld [vmem:[%s0 + $0x38] sm:$0xff]
    %v62 = vld [vmem:[%s0 + $0x40] sm:$0xff]
    %v63 = vld [vmem:[%s0 + $0x48] sm:$0xff]
    %v64 = vld [vmem:[%s0 + $0x50] sm:$0xff]
    %v65 = vld [vmem:[%s0 + $0x58] sm:$0xff]
    %v66 = vld [vmem:[%s0 + $0x60] sm:$0xff]
    %v67 = vld [vmem:[%s0 + $0x68] sm:$0xff]
    %v68 = vld [vmem:[%s0 + $0x70] sm:$0xff]
    %v69 = vld [vmem:[%s0 + $0x78] sm:$0xff]
    %v70 = vld [vmem:[%s1] sm:$0xff]
    %v71 = vld [vmem:[%s1 + $0x8] sm:$0xff]
    %v72 = vld [vmem:[%s1 + $0x10] sm:$0xff]
    %v73 = vld [vmem:[%s1 + $0x18] sm:$0xf]
    %v74 = vld [vmem:[%s2] sm:$0x1]
    %v76 = vlaneseq
    %v77 = vshrl.u32 %v76, 7
    %v78 = vsub.s32 0, %v77
    %v79 = vrot.slane %v74, %v78
    %vm81 = vcmask 228352
    %v83 = vsel %vm81, %v54, 0
    %v86 = vsel %vm81, %v55, 0
    %v89 = vsel %vm81, %v56, 0
    %v92 = vsel %vm81, %v57, 0
    %v95 = vsel %vm81, %v58, 0
    %v98 = vsel %vm81, %v59, 0
    %v101 = vsel %vm81, %v60, 0
    %v104 = vsel %vm81, %v61, 0
    %v107 = vsel %vm81, %v62, 0
    %v110 = vsel %vm81, %v63, 0
    %v113 = vsel %vm81, %v64, 0
    %v116 = vsel %vm81, %v65, 0
    %v119 = vsel %vm81, %v66, 0
    %v122 = vsel %vm81, %v67, 0
    %v125 = vsel %vm81, %v68, 0
    %v128 = vsel %vm81, %v69, 0
    %vm130 = vcmask 1043456
    %v132 = vsel %vm130, %v73, 0
    %134 = vmatprep.subr.mxu0 0.0
    %135 = vmatpush1.msra.mxu0 0.0
    %136 = vmatprep.subr.mxu0 0.0
    %137 = vmatpush1.msra.mxu0 0.0
    %138 = vmatprep.subr.mxu0 0.0
    %139 = vmatpush1.msra.mxu0 0.0
    %140 = vmatprep.subr.mxu0 0.0
    %141 = vmatpush1.msra.mxu0 0.0
    %142 = vmatprep.subr.mxu0 0.0
    %143 = vmatpush1.msra.mxu0 0.0
    %144 = vmatprep.subr.mxu0 0.0
    %145 = vmatpush1.msra.mxu0 0.0
    %146 = vmatprep.subr.mxu0 0.0
    %147 = vmatpush1.msra.mxu0 0.0
    %148 = vmatprep.subr.mxu0 0.0
    %149 = vmatpush1.msra.mxu0 0.0
    %150 = vmatprep.subr.mxu0 0.0
    %151 = vmatpush1.msra.mxu0 0.0
    %152 = vmatprep.subr.mxu0 0.0
    %153 = vmatpush1.msra.mxu0 0.0
    %154 = vmatprep.subr.mxu0 0.0
    %155 = vmatpush1.msra.mxu0 0.0
    %156 = vmatprep.subr.mxu0 0.0
    %157 = vmatpush1.msra.mxu0 0.0
    %158 = vmatprep.subr.mxu0 0.0
    %159 = vmatpush1.msra.mxu0 %v132
    %160 = vmatprep.subr.mxu0 0.0
    %161 = vmatpush1.msra.mxu0 %v72
    %162 = vmatprep.subr.mxu0 0.0
    %163 = vmatpush1.msra.mxu0 %v71
    %164 = vmatprep.subr.mxu0 0.0
    %165 = vmatpush1.msra.mxu0 %v70
    %166 = vmatprep.subr.mxu0 0.0
    %167 = vmatpush2.msra.mxu0 0.0
    %168 = vmatprep.subr.mxu0 0.0
    %169 = vmatpush2.msra.mxu0 0.0
    %170 = vmatprep.subr.mxu0 0.0
    %171 = vmatpush2.msra.mxu0 0.0
    %172 = vmatprep.subr.mxu0 0.0
    %173 = vmatpush2.msra.mxu0 0.0
    %174 = vmatprep.subr.mxu0 0.0
    %175 = vmatpush2.msra.mxu0 0.0
    %176 = vmatprep.subr.mxu0 0.0
    %177 = vmatpush2.msra.mxu0 0.0
    %178 = vmatprep.subr.mxu0 0.0
    %179 = vmatpush2.msra.mxu0 0.0
    %180 = vmatprep.subr.mxu0 0.0
    %181 = vmatpush2.msra.mxu0 0.0
    %182 = vmatprep.subr.mxu0 0.0
    %183 = vmatpush2.msra.mxu0 0.0
    %184 = vmatprep.subr.mxu0 0.0
    %185 = vmatpush2.msra.mxu0 0.0
    %186 = vmatprep.subr.mxu0 0.0
    %187 = vmatpush2.msra.mxu0 0.0
    %188 = vmatprep.subr.mxu0 0.0
    %189 = vmatpush2.msra.mxu0 0.0
    %190 = vmatprep.subr.mxu0 0.0
    %191 = vmatpush2.msra.mxu0 0.0
    %192 = vmatprep.subr.mxu0 0.0
    %193 = vmatpush2.msra.mxu0 0.0
    %194 = vmatprep.subr.mxu0 0.0
    %195 = vmatpush2.msra.mxu0 0.0
    %196 = vmatprep.subr.mxu0 0.0
    %197 = vmatpush2.msra.mxu0 0.0
    %198 = vmatprep.mubr.f32.mxu0 0.0
    %199 = vmatmul.mubr.f32.gmra.mxu0 %v83
    %v200 = vpop.f32.mrf.mxu0
    %v201 = vadd.f32 %v79, %v200
    %v202 = vpop.f32.mrf.mxu0
    %203 = vmatprep.mubr.f32.mxu0 0.0
    %204 = vmatmul.mubr.f32.gmra.mxu0 %v86
    %v205 = vpop.f32.mrf.mxu0
    %v206 = vadd.f32 %v79, %v205
    %v207 = vpop.f32.mrf.mxu0
    %208 = vmatprep.mubr.f32.mxu0 0.0
    %209 = vmatmul.mubr.f32.gmra.mxu0 %v89
    %v210 = vpop.f32.mrf.mxu0
    %v211 = vadd.f32 %v79, %v210
    %v212 = vpop.f32.mrf.mxu0
    %213 = vmatprep.mubr.f32.mxu0 0.0
    %214 = vmatmul.mubr.f32.gmra.mxu0 %v92
    %v215 = vpop.f32.mrf.mxu0
    %v216 = vadd.f32 %v79, %v215
    %v217 = vpop.f32.mrf.mxu0
    %218 = vmatprep.mubr.f32.mxu0 0.0
    %219 = vmatmul.mubr.f32.gmra.mxu0 %v95
    %v220 = vpop.f32.mrf.mxu0
    %v221 = vadd.f32 %v79, %v220
    %v222 = vpop.f32.mrf.mxu0
    %223 = vmatprep.mubr.f32.mxu0 0.0
    %224 = vmatmul.mubr.f32.gmra.mxu0 %v98
    %v225 = vpop.f32.mrf.mxu0
    %v226 = vadd.f32 %v79, %v225
    %v227 = vpop.f32.mrf.mxu0
    %228 = vmatprep.mubr.f32.mxu0 0.0
    %229 = vmatmul.mubr.f32.gmra.mxu0 %v101
    %v230 = vpop.f32.mrf.mxu0
    %v231 = vadd.f32 %v79, %v230
    %v232 = vpop.f32.mrf.mxu0
    %233 = vmatprep.mubr.f32.mxu0 0.0
    %234 = vmatmul.mubr.f32.gmra.mxu0 %v104
    %v235 = vpop.f32.mrf.mxu0
    %v236 = vadd.f32 %v79, %v235
    %v237 = vpop.f32.mrf.mxu0
    %238 = vmatprep.mubr.f32.mxu0 0.0
    %239 = vmatmul.mubr.f32.gmra.mxu0 %v107
    %v240 = vpop.f32.mrf.mxu0
    %v241 = vadd.f32 %v79, %v240
    %v242 = vpop.f32.mrf.mxu0
    %243 = vmatprep.mubr.f32.mxu0 0.0
    %244 = vmatmul.mubr.f32.gmra.mxu0 %v110
    %v245 = vpop.f32.mrf.mxu0
    %v246 = vadd.f32 %v79, %v245
    %v247 = vpop.f32.mrf.mxu0
    %248 = vmatprep.mubr.f32.mxu0 0.0
    %249 = vmatmul.mubr.f32.gmra.mxu0 %v113
    %v250 = vpop.f32.mrf.mxu0
    %v251 = vadd.f32 %v79, %v250
    %v252 = vpop.f32.mrf.mxu0
    %253 = vmatprep.mubr.f32.mxu0 0.0
    %254 = vmatmul.mubr.f32.gmra.mxu0 %v116
    %v255 = vpop.f32.mrf.mxu0
    %v256 = vadd.f32 %v79, %v255
    %v257 = vpop.f32.mrf.mxu0
    %258 = vmatprep.mubr.f32.mxu0 0.0
    %259 = vmatmul.mubr.f32.gmra.mxu0 %v119
    %v260 = vpop.f32.mrf.mxu0
    %v261 = vadd.f32 %v79, %v260
    %v262 = vpop.f32.mrf.mxu0
    %263 = vmatprep.mubr.f32.mxu0 0.0
    %264 = vmatmul.mubr.f32.gmra.mxu0 %v122
    %v265 = vpop.f32.mrf.mxu0
    %v266 = vadd.f32 %v79, %v265
    %v267 = vpop.f32.mrf.mxu0
    %268 = vmatprep.mubr.f32.mxu0 0.0
    %269 = vmatmul.mubr.f32.gmra.mxu0 %v125
    %v270 = vpop.f32.mrf.mxu0
    %v271 = vadd.f32 %v79, %v270
    %v272 = vpop.f32.mrf.mxu0
    %273 = vmatprep.mubr.f32.mxu0 0.0
    %274 = vmatmul.mubr.f32.gmra.mxu0 %v128
    %v275 = vpop.f32.mrf.mxu0
    %v276 = vadd.f32 %v79, %v275
    %v277 = vpop.f32.mrf.mxu0
    %278 = vdwg.mxu0
    %v279 = vmul.f32 %v201, 0.01
    %v280 = vmul.f32 %v206, 0.01
    %v281 = vmul.f32 %v211, 0.01
    %v282 = vmul.f32 %v216, 0.01
    %v283 = vmul.f32 %v221, 0.01
    %v284 = vmul.f32 %v226, 0.01
    %v285 = vmul.f32 %v231, 0.01
    %v286 = vmul.f32 %v236, 0.01
    %v287 = vmul.f32 %v241, 0.01
    %v288 = vmul.f32 %v246, 0.01
    %v289 = vmul.f32 %v251, 0.01
    %v290 = vmul.f32 %v256, 0.01
    %v291 = vmul.f32 %v261, 0.01
    %v292 = vmul.f32 %v266, 0.01
    %v293 = vmul.f32 %v271, 0.01
    %v294 = vmul.f32 %v276, 0.01
    %v295 = vmax.f32 %v201, %v279
    %v296 = vmax.f32 %v206, %v280
    %v297 = vmax.f32 %v211, %v281
    %v298 = vmax.f32 %v216, %v282
    %v299 = vmax.f32 %v221, %v283
    %v300 = vmax.f32 %v226, %v284
    %v301 = vmax.f32 %v231, %v285
    %v302 = vmax.f32 %v236, %v286
    %v303 = vmax.f32 %v241, %v287
    %v304 = vmax.f32 %v246, %v288
    %v305 = vmax.f32 %v251, %v289
    %v306 = vmax.f32 %v256, %v290
    %v307 = vmax.f32 %v261, %v291
    %v308 = vmax.f32 %v266, %v292
    %v309 = vmax.f32 %v271, %v293
    %v310 = vmax.f32 %v276, %v294
    %v311 = vrot.slane %v295, 1
    %v312 = vrot.slane %v296, 1
    %v313 = vrot.slane %v297, 1
    %v314 = vrot.slane %v298, 1
    %v315 = vrot.slane %v299, 1
    %v316 = vrot.slane %v300, 1
    %v317 = vrot.slane %v301, 1
    %v318 = vrot.slane %v302, 1
    %v319 = vrot.slane %v303, 1
    %v320 = vrot.slane %v304, 1
    %v321 = vrot.slane %v305, 1
    %v322 = vrot.slane %v306, 1
    %v323 = vrot.slane %v307, 1
    %v324 = vrot.slane %v308, 1
    %v325 = vrot.slane %v309, 1
    %v326 = vrot.slane %v310, 1
    %v327 = vlaneseq
    %v328 = vshrl.u32 %v327, 7
    %vm329 = vcmp.lt.s32.totalorder %v328, 7
    %v330 = vsel %vm329, %v325, %v326
    %v331 = vsel %vm329, %v324, %v325
    %v332 = vsel %vm329, %v323, %v324
    %v333 = vsel %vm329, %v322, %v323
    %v334 = vsel %vm329, %v321, %v322
    %v335 = vsel %vm329, %v320, %v321
    %v336 = vsel %vm329, %v319, %v320
    %v337 = vsel %vm329, %v318, %v319
    %v338 = vsel %vm329, %v317, %v318
    %v339 = vsel %vm329, %v316, %v317
    %v340 = vsel %vm329, %v315, %v316
    %v341 = vsel %vm329, %v314, %v315
    %v342 = vsel %vm329, %v313, %v314
    %v343 = vsel %vm329, %v312, %v313
    %v344 = vsel %vm329, %v311, %v312
    %v345 = vsel %vm329, %v326, %v311
    %v346 = vmax.f32 %v295, %v344
    %v347 = vmax.f32 %v296, %v343
    %v348 = vmax.f32 %v297, %v342
    %v349 = vmax.f32 %v298, %v341
    %v350 = vmax.f32 %v299, %v340
    %v351 = vmax.f32 %v300, %v339
    %v352 = vmax.f32 %v301, %v338
    %v353 = vmax.f32 %v302, %v337
    %v354 = vmax.f32 %v303, %v336
    %v355 = vmax.f32 %v304, %v335
    %v356 = vmax.f32 %v305, %v334
    %v357 = vmax.f32 %v306, %v333
    %v358 = vmax.f32 %v307, %v332
    %v359 = vmax.f32 %v308, %v331
    %v360 = vmax.f32 %v309, %v330
    %v361 = vmax.f32 %v310, %v345
    %v362 = vld [vmem:[%s3] sm:$0xff]
    %v363 = vld [vmem:[%s3 + $0x8] sm:$0xff]
    %v364 = vld [vmem:[%s3 + $0x10] sm:$0xff]
    %v365 = vld [vmem:[%s3 + $0x18] sm:$0xff]
    %v366 = vld [vmem:[%s3 + $0x20] sm:$0xff]
    %v367 = vld [vmem:[%s3 + $0x28] sm:$0xff]
    %v368 = vld [vmem:[%s3 + $0x30] sm:$0xff]
    %v369 = vld [vmem:[%s3 + $0x38] sm:$0xff]
    %370 = vmatprep.subr.mxu0 0.0
    %371 = vmatpush1.msra.mxu0 %v361
    %372 = vmatprep.subr.mxu0 0.0
    %373 = vmatpush1.msra.mxu0 %v360
    %374 = vmatprep.subr.mxu0 0.0
    %375 = vmatpush1.msra.mxu0 %v359
    %376 = vmatprep.subr.mxu0 0.0
    %377 = vmatpush1.msra.mxu0 %v358
    %378 = vmatprep.subr.mxu0 0.0
    %379 = vmatpush1.msra.mxu0 %v357
    %380 = vmatprep.subr.mxu0 0.0
    %381 = vmatpush1.msra.mxu0 %v356
    %382 = vmatprep.subr.mxu0 0.0
    %383 = vmatpush1.msra.mxu0 %v355
    %384 = vmatprep.subr.mxu0 0.0
    %385 = vmatpush1.msra.mxu0 %v354
    %386 = vmatprep.subr.mxu0 0.0
    %387 = vmatpush1.msra.mxu0 %v353
    %388 = vmatprep.subr.mxu0 0.0
    %389 = vmatpush1.msra.mxu0 %v352
    %390 = vmatprep.subr.mxu0 0.0
    %391 = vmatpush1.msra.mxu0 %v351
    %392 = vmatprep.subr.mxu0 0.0
    %393 = vmatpush1.msra.mxu0 %v350
    %394 = vmatprep.subr.mxu0 0.0
    %395 = vmatpush1.msra.mxu0 %v349
    %396 = vmatprep.subr.mxu0 0.0
    %397 = vmatpush1.msra.mxu0 %v348
    %398 = vmatprep.subr.mxu0 0.0
    %399 = vmatpush1.msra.mxu0 %v347
    %400 = vmatprep.subr.mxu0 0.0
    %401 = vmatpush1.msra.mxu0 %v346
    %402 = vmatprep.subr.mxu0 0.0
    %403 = vmatpush2.msra.mxu0 0.0
    %404 = vmatprep.subr.mxu0 0.0
    %405 = vmatpush2.msra.mxu0 0.0
    %406 = vmatprep.subr.mxu0 0.0
    %407 = vmatpush2.msra.mxu0 0.0
    %408 = vmatprep.subr.mxu0 0.0
    %409 = vmatpush2.msra.mxu0 0.0
    %410 = vmatprep.subr.mxu0 0.0
    %411 = vmatpush2.msra.mxu0 0.0
    %412 = vmatprep.subr.mxu0 0.0
    %413 = vmatpush2.msra.mxu0 0.0
    %414 = vmatprep.subr.mxu0 0.0
    %415 = vmatpush2.msra.mxu0 0.0
    %416 = vmatprep.subr.mxu0 0.0
    %417 = vmatpush2.msra.mxu0 0.0
    %418 = vmatprep.subr.mxu0 0.0
    %419 = vmatpush2.msra.mxu0 0.0
    %420 = vmatprep.subr.mxu0 0.0
    %421 = vmatpush2.msra.mxu0 0.0
    %422 = vmatprep.subr.mxu0 0.0
    %423 = vmatpush2.msra.mxu0 0.0
    %424 = vmatprep.subr.mxu0 0.0
    %425 = vmatpush2.msra.mxu0 0.0
    %426 = vmatprep.subr.mxu0 0.0
    %427 = vmatpush2.msra.mxu0 0.0
    %428 = vmatprep.subr.mxu0 0.0
    %429 = vmatpush2.msra.mxu0 0.0
    %430 = vmatprep.subr.mxu0 0.0
    %431 = vmatpush2.msra.mxu0 0.0
    %432 = vmatprep.subr.mxu0 0.0
    %433 = vmatpush2.msra.mxu0 0.0
    %434 = vmatprep.mubr.f32.mxu0 0.0
    %435 = vmatmul.mubr.f32.gmra.mxu0 %v362
    %v436 = vpop.f32.mrf.mxu0
    %v437 = vadd.f32 0.0, %v436
    %v438 = vpop.f32.mrf.mxu0
    %439 = vmatprep.mubr.f32.mxu0 0.0
    %440 = vmatmul.mubr.f32.gmra.mxu0 %v363
    %v441 = vpop.f32.mrf.mxu0
    %v442 = vadd.f32 0.0, %v441
    %v443 = vpop.f32.mrf.mxu0
    %444 = vmatprep.mubr.f32.mxu0 0.0
    %445 = vmatmul.mubr.f32.gmra.mxu0 %v364
    %v446 = vpop.f32.mrf.mxu0
    %v447 = vadd.f32 0.0, %v446
    %v448 = vpop.f32.mrf.mxu0
    %449 = vmatprep.mubr.f32.mxu0 0.0
    %450 = vmatmul.mubr.f32.gmra.mxu0 %v365
    %v451 = vpop.f32.mrf.mxu0
    %v452 = vadd.f32 0.0, %v451
    %v453 = vpop.f32.mrf.mxu0
    %454 = vmatprep.mubr.f32.mxu0 0.0
    %455 = vmatmul.mubr.f32.gmra.mxu0 %v366
    %v456 = vpop.f32.mrf.mxu0
    %v457 = vadd.f32 0.0, %v456
    %v458 = vpop.f32.mrf.mxu0
    %459 = vmatprep.mubr.f32.mxu0 0.0
    %460 = vmatmul.mubr.f32.gmra.mxu0 %v367
    %v461 = vpop.f32.mrf.mxu0
    %v462 = vadd.f32 0.0, %v461
    %v463 = vpop.f32.mrf.mxu0
    %464 = vmatprep.mubr.f32.mxu0 0.0
    %465 = vmatmul.mubr.f32.gmra.mxu0 %v368
    %v466 = vpop.f32.mrf.mxu0
    %v467 = vadd.f32 0.0, %v466
    %v468 = vpop.f32.mrf.mxu0
    %469 = vmatprep.mubr.f32.mxu0 0.0
    %470 = vmatmul.mubr.f32.gmra.mxu0 %v369
    %v471 = vpop.f32.mrf.mxu0
    %v472 = vadd.f32 0.0, %v471
    %v473 = vpop.f32.mrf.mxu0
    %474 = vdwg.mxu0
    %v475 = vrot.slane %v437, 1
    %v476 = vrot.slane %v442, 1
    %v477 = vrot.slane %v447, 1
    %v478 = vrot.slane %v452, 1
    %v479 = vrot.slane %v457, 1
    %v480 = vrot.slane %v462, 1
    %v481 = vrot.slane %v467, 1
    %v482 = vrot.slane %v472, 1
    %v483 = vsel %vm329, %v481, %v482
    %v484 = vsel %vm329, %v480, %v481
    %v485 = vsel %vm329, %v479, %v480
    %v486 = vsel %vm329, %v478, %v479
    %v487 = vsel %vm329, %v477, %v478
    %v488 = vsel %vm329, %v476, %v477
    %v489 = vsel %vm329, %v475, %v476
    %v490 = vsel %vm329, %v482, %v475
    %v491 = vrot.slane %v437, 2
    %v492 = vrot.slane %v442, 2
    %v493 = vrot.slane %v447, 2
    %v494 = vrot.slane %v452, 2
    %v495 = vrot.slane %v457, 2
    %v496 = vrot.slane %v462, 2
    %v497 = vrot.slane %v467, 2
    %v498 = vrot.slane %v472, 2
    %vm499 = vcmp.lt.s32.totalorder %v328, 6
    %v500 = vsel %vm499, %v497, %v498
    %v501 = vsel %vm499, %v496, %v497
    %v502 = vsel %vm499, %v495, %v496
    %v503 = vsel %vm499, %v494, %v495
    %v504 = vsel %vm499, %v493, %v494
    %v505 = vsel %vm499, %v492, %v493
    %v506 = vsel %vm499, %v491, %v492
    %v507 = vsel %vm499, %v498, %v491
    %v508 = vrot.slane %v437, 3
    %v509 = vrot.slane %v442, 3
    %v510 = vrot.slane %v447, 3
    %v511 = vrot.slane %v452, 3
    %v512 = vrot.slane %v457, 3
    %v513 = vrot.slane %v462, 3
    %v514 = vrot.slane %v467, 3
    %v515 = vrot.slane %v472, 3
    %vm516 = vcmp.lt.s32.totalorder %v328, 5
    %v517 = vsel %vm516, %v514, %v515
    %v518 = vsel %vm516, %v513, %v514
    %v519 = vsel %vm516, %v512, %v513
    %v520 = vsel %vm516, %v511, %v512
    %v521 = vsel %vm516, %v510, %v511
    %v522 = vsel %vm516, %v509, %v510
    %v523 = vsel %vm516, %v508, %v509
    %v524 = vsel %vm516, %v515, %v508
    %v525 = vrot.slane %v437, 4
    %v526 = vrot.slane %v442, 4
    %v527 = vrot.slane %v447, 4
    %v528 = vrot.slane %v452, 4
    %v529 = vrot.slane %v457, 4
    %v530 = vrot.slane %v462, 4
    %v531 = vrot.slane %v467, 4
    %v532 = vrot.slane %v472, 4
    %vm533 = vcmp.lt.s32.totalorder %v328, 4
    %v534 = vsel %vm533, %v531, %v532
    %v535 = vsel %vm533, %v530, %v531
    %v536 = vsel %vm533, %v529, %v530
    %v537 = vsel %vm533, %v528, %v529
    %v538 = vsel %vm533, %v527, %v528
    %v539 = vsel %vm533, %v526, %v527
    %v540 = vsel %vm533, %v525, %v526
    %v541 = vsel %vm533, %v532, %v525
    %v542 = vrot.slane %v437, 5
    %v543 = vrot.slane %v442, 5
    %v544 = vrot.slane %v447, 5
    %v545 = vrot.slane %v452, 5
    %v546 = vrot.slane %v457, 5
    %v547 = vrot.slane %v462, 5
    %v548 = vrot.slane %v467, 5
    %v549 = vrot.slane %v472, 5
    %vm550 = vcmp.lt.s32.totalorder %v328, 3
    %v551 = vsel %vm550, %v548, %v549
    %v552 = vsel %vm550, %v547, %v548
    %v553 = vsel %vm550, %v546, %v547
    %v554 = vsel %vm550, %v545, %v546
    %v555 = vsel %vm550, %v544, %v545
    %v556 = vsel %vm550, %v543, %v544
    %v557 = vsel %vm550, %v542, %v543
    %v558 = vsel %vm550, %v549, %v542
    %567 = vrot.lane.b32.xlu0 %v489, 64
    %v568 = vpop.permute.xlu0 %567
    %569 = vrot.lane.b32.xlu0 %v488, 64
    %v570 = vpop.permute.xlu0 %569
    %571 = vrot.lane.b32.xlu0 %v487, 64
    %v572 = vpop.permute.xlu0 %571
    %573 = vrot.lane.b32.xlu0 %v486, 64
    %v574 = vpop.permute.xlu0 %573
    %575 = vrot.lane.b32.xlu0 %v485, 64
    %v576 = vpop.permute.xlu0 %575
    %577 = vrot.lane.b32.xlu0 %v484, 64
    %v578 = vpop.permute.xlu0 %577
    %579 = vrot.lane.b32.xlu0 %v483, 64
    %v580 = vpop.permute.xlu0 %579
    %581 = vrot.lane.b32.xlu0 %v490, 64
    %v582 = vpop.permute.xlu0 %581
    %599 = vrot.lane.b32.xlu0 %v523, 64
    %v600 = vpop.permute.xlu0 %599
    %601 = vrot.lane.b32.xlu0 %v522, 64
    %v602 = vpop.permute.xlu0 %601
    %603 = vrot.lane.b32.xlu0 %v521, 64
    %v604 = vpop.permute.xlu0 %603
    %605 = vrot.lane.b32.xlu0 %v520, 64
    %v606 = vpop.permute.xlu0 %605
    %607 = vrot.lane.b32.xlu0 %v519, 64
    %v608 = vpop.permute.xlu0 %607
    %609 = vrot.lane.b32.xlu0 %v518, 64
    %v610 = vpop.permute.xlu0 %609
    %611 = vrot.lane.b32.xlu0 %v517, 64
    %v612 = vpop.permute.xlu0 %611
    %613 = vrot.lane.b32.xlu0 %v524, 64
    %v614 = vpop.permute.xlu0 %613
    %631 = vrot.lane.b32.xlu0 %v557, 64
    %v632 = vpop.permute.xlu0 %631
    %633 = vrot.lane.b32.xlu0 %v556, 64
    %v634 = vpop.permute.xlu0 %633
    %635 = vrot.lane.b32.xlu0 %v555, 64
    %v636 = vpop.permute.xlu0 %635
    %637 = vrot.lane.b32.xlu0 %v554, 64
    %v638 = vpop.permute.xlu0 %637
    %639 = vrot.lane.b32.xlu0 %v553, 64
    %v640 = vpop.permute.xlu0 %639
    %641 = vrot.lane.b32.xlu0 %v552, 64
    %v642 = vpop.permute.xlu0 %641
    %643 = vrot.lane.b32.xlu0 %v551, 64
    %v644 = vpop.permute.xlu0 %643
    %645 = vrot.lane.b32.xlu0 %v558, 64
    %v646 = vpop.permute.xlu0 %645
    %vm655 = vcmask 523264
    %v656 = vsel %vm655, %v437, %v568
    %v657 = vsel %vm655, %v442, %v570
    %v658 = vsel %vm655, %v447, %v572
    %v659 = vsel %vm655, %v452, %v574
    %v660 = vsel %vm655, %v457, %v576
    %v661 = vsel %vm655, %v462, %v578
    %v662 = vsel %vm655, %v467, %v580
    %v663 = vsel %vm655, %v472, %v582
    %v664 = vsel %vm655, %v506, %v600
    %v665 = vsel %vm655, %v505, %v602
    %v666 = vsel %vm655, %v504, %v604
    %v667 = vsel %vm655, %v503, %v606
    %v668 = vsel %vm655, %v502, %v608
    %v669 = vsel %vm655, %v501, %v610
    %v670 = vsel %vm655, %v500, %v612
    %v671 = vsel %vm655, %v507, %v614
    %v672 = vsel %vm655, %v540, %v632
    %v673 = vsel %vm655, %v539, %v634
    %v674 = vsel %vm655, %v538, %v636
    %v675 = vsel %vm655, %v537, %v638
    %v676 = vsel %vm655, %v536, %v640
    %v677 = vsel %vm655, %v535, %v642
    %v678 = vsel %vm655, %v534, %v644
    %v679 = vsel %vm655, %v541, %v646
    %v680 = vld [vmem:[%s4] sm:$0xff]
    %v681 = vld [vmem:[%s4 + $0x8] sm:$0xff]
    %v682 = vld [vmem:[%s4 + $0x10] sm:$0xff]
    %v683 = vld [vmem:[%s4 + $0x18] sm:$0xff]
    %v684 = vld [vmem:[%s4 + $0x20] sm:$0xff]
    %v685 = vld [vmem:[%s4 + $0x28] sm:$0xff]
    %v686 = vld [vmem:[%s4 + $0x30] sm:$0xff]
    %v687 = vld [vmem:[%s4 + $0x38] sm:$0xff]
    %v688 = vld [vmem:[%s4 + $0x40] sm:$0xff]
    %v689 = vld [vmem:[%s4 + $0x48] sm:$0xff]
    %v690 = vld [vmem:[%s4 + $0x50] sm:$0xff]
    %v691 = vld [vmem:[%s4 + $0x58] sm:$0xff]
    %v692 = vld [vmem:[%s4 + $0x60] sm:$0xff]
    %v693 = vld [vmem:[%s4 + $0x68] sm:$0xff]
    %v694 = vld [vmem:[%s4 + $0x70] sm:$0xff]
    %v695 = vld [vmem:[%s4 + $0x78] sm:$0xff]
    %v696 = vld [vmem:[%s4 + $0x80] sm:$0xff]
    %v697 = vld [vmem:[%s4 + $0x88] sm:$0xff]
    %v698 = vld [vmem:[%s4 + $0x90] sm:$0xff]
    %v699 = vld [vmem:[%s4 + $0x98] sm:$0xff]
    %v700 = vld [vmem:[%s4 + $0xa0] sm:$0xff]
    %v701 = vld [vmem:[%s4 + $0xa8] sm:$0xff]
    %v702 = vld [vmem:[%s4 + $0xb0] sm:$0xff]
    %v703 = vld [vmem:[%s4 + $0xb8] sm:$0xff]
    %v704 = vld [vmem:[%s4 + $0xc0] sm:$0xff]
    %v705 = vld [vmem:[%s4 + $0xc8] sm:$0xff]
    %v706 = vld [vmem:[%s4 + $0xd0] sm:$0xff]
    %v707 = vld [vmem:[%s4 + $0xd8] sm:$0xff]
    %v708 = vld [vmem:[%s4 + $0xe0] sm:$0xff]
    %v709 = vld [vmem:[%s4 + $0xe8] sm:$0xff]
    %v710 = vld [vmem:[%s4 + $0xf0] sm:$0xff]
    %v711 = vld [vmem:[%s4 + $0xf8] sm:$0xff]
    %v712 = vld [vmem:[%s4 + $0x100] sm:$0xff]
    %v713 = vld [vmem:[%s4 + $0x108] sm:$0xff]
    %v714 = vld [vmem:[%s4 + $0x110] sm:$0xff]
    %v715 = vld [vmem:[%s4 + $0x118] sm:$0xff]
    %v716 = vld [vmem:[%s4 + $0x120] sm:$0xff]
    %v717 = vld [vmem:[%s4 + $0x128] sm:$0xff]
    %v718 = vld [vmem:[%s4 + $0x130] sm:$0xff]
    %v719 = vld [vmem:[%s4 + $0x138] sm:$0xff]
    %v720 = vld [vmem:[%s4 + $0x140] sm:$0xff]
    %v721 = vld [vmem:[%s4 + $0x148] sm:$0xff]
    %v722 = vld [vmem:[%s4 + $0x150] sm:$0xff]
    %v723 = vld [vmem:[%s4 + $0x158] sm:$0xff]
    %v724 = vld [vmem:[%s4 + $0x160] sm:$0xff]
    %v725 = vld [vmem:[%s4 + $0x168] sm:$0xff]
    %v726 = vld [vmem:[%s4 + $0x170] sm:$0xff]
    %v727 = vld [vmem:[%s4 + $0x178] sm:$0xff]
    %v728 = vld [vmem:[%s5] sm:$0x1]
    %v730 = vlaneseq
    %v731 = vshrl.u32 %v730, 7
    %v732 = vsub.s32 0, %v731
    %v733 = vrot.slane %v728, %v732
    %735 = vmatprep.subr.mxu0 0.0
    %736 = vmatpush1.msra.mxu0 %v695
    %737 = vmatprep.subr.mxu0 0.0
    %738 = vmatpush1.msra.mxu0 %v694
    %739 = vmatprep.subr.mxu0 0.0
    %740 = vmatpush1.msra.mxu0 %v693
    %741 = vmatprep.subr.mxu0 0.0
    %742 = vmatpush1.msra.mxu0 %v692
    %743 = vmatprep.subr.mxu0 0.0
    %744 = vmatpush1.msra.mxu0 %v691
    %745 = vmatprep.subr.mxu0 0.0
    %746 = vmatpush1.msra.mxu0 %v690
    %747 = vmatprep.subr.mxu0 0.0
    %748 = vmatpush1.msra.mxu0 %v689
    %749 = vmatprep.subr.mxu0 0.0
    %750 = vmatpush1.msra.mxu0 %v688
    %751 = vmatprep.subr.mxu0 0.0
    %752 = vmatpush1.msra.mxu0 %v687
    %753 = vmatprep.subr.mxu0 0.0
    %754 = vmatpush1.msra.mxu0 %v686
    %755 = vmatprep.subr.mxu0 0.0
    %756 = vmatpush1.msra.mxu0 %v685
    %757 = vmatprep.subr.mxu0 0.0
    %758 = vmatpush1.msra.mxu0 %v684
    %759 = vmatprep.subr.mxu0 0.0
    %760 = vmatpush1.msra.mxu0 %v683
    %761 = vmatprep.subr.mxu0 0.0
    %762 = vmatpush1.msra.mxu0 %v682
    %763 = vmatprep.subr.mxu0 0.0
    %764 = vmatpush1.msra.mxu0 %v681
    %765 = vmatprep.subr.mxu0 0.0
    %766 = vmatpush1.msra.mxu0 %v680
    %767 = vmatprep.subr.mxu0 0.0
    %768 = vmatpush2.msra.mxu0 %v711
    %769 = vmatprep.subr.mxu0 0.0
    %770 = vmatpush2.msra.mxu0 %v710
    %771 = vmatprep.subr.mxu0 0.0
    %772 = vmatpush2.msra.mxu0 %v709
    %773 = vmatprep.subr.mxu0 0.0
    %774 = vmatpush2.msra.mxu0 %v708
    %775 = vmatprep.subr.mxu0 0.0
    %776 = vmatpush2.msra.mxu0 %v707
    %777 = vmatprep.subr.mxu0 0.0
    %778 = vmatpush2.msra.mxu0 %v706
    %779 = vmatprep.subr.mxu0 0.0
    %780 = vmatpush2.msra.mxu0 %v705
    %781 = vmatprep.subr.mxu0 0.0
    %782 = vmatpush2.msra.mxu0 %v704
    %783 = vmatprep.subr.mxu0 0.0
    %784 = vmatpush2.msra.mxu0 %v703
    %785 = vmatprep.subr.mxu0 0.0
    %786 = vmatpush2.msra.mxu0 %v702
    %787 = vmatprep.subr.mxu0 0.0
    %788 = vmatpush2.msra.mxu0 %v701
    %789 = vmatprep.subr.mxu0 0.0
    %790 = vmatpush2.msra.mxu0 %v700
    %791 = vmatprep.subr.mxu0 0.0
    %792 = vmatpush2.msra.mxu0 %v699
    %793 = vmatprep.subr.mxu0 0.0
    %794 = vmatpush2.msra.mxu0 %v698
    %795 = vmatprep.subr.mxu0 0.0
    %796 = vmatpush2.msra.mxu0 %v697
    %797 = vmatprep.subr.mxu0 0.0
    %798 = vmatpush2.msra.mxu0 %v696
    %799 = vmatprep.mubr.f32.mxu0 %v664
    %800 = vmatmul.mubr.f32.gmra.mxu0 %v656
    %v801 = vpop.f32.mrf.mxu0
    %v802 = vadd.f32 %v733, %v801
    %v803 = vpop.f32.mrf.mxu0
    %804 = vmatprep.mubr.f32.mxu0 %v665
    %805 = vmatmul.mubr.f32.gmra.mxu0 %v657
    %v806 = vpop.f32.mrf.mxu0
    %v807 = vadd.f32 %v733, %v806
    %v808 = vpop.f32.mrf.mxu0
    %809 = vmatprep.mubr.f32.mxu0 %v666
    %810 = vmatmul.mubr.f32.gmra.mxu0 %v658
    %v811 = vpop.f32.mrf.mxu0
    %v812 = vadd.f32 %v733, %v811
    %v813 = vpop.f32.mrf.mxu0
    %814 = vmatprep.mubr.f32.mxu0 %v667
    %815 = vmatmul.mubr.f32.gmra.mxu0 %v659
    %v816 = vpop.f32.mrf.mxu0
    %v817 = vadd.f32 %v733, %v816
    %v818 = vpop.f32.mrf.mxu0
    %819 = vmatprep.mubr.f32.mxu0 %v668
    %820 = vmatmul.mubr.f32.gmra.mxu0 %v660
    %v821 = vpop.f32.mrf.mxu0
    %v822 = vadd.f32 %v733, %v821
    %v823 = vpop.f32.mrf.mxu0
    %824 = vmatprep.mubr.f32.mxu0 %v669
    %825 = vmatmul.mubr.f32.gmra.mxu0 %v661
    %v826 = vpop.f32.mrf.mxu0
    %v827 = vadd.f32 %v733, %v826
    %v828 = vpop.f32.mrf.mxu0
    %829 = vmatprep.mubr.f32.mxu0 %v670
    %830 = vmatmul.mubr.f32.gmra.mxu0 %v662
    %v831 = vpop.f32.mrf.mxu0
    %v832 = vadd.f32 %v733, %v831
    %v833 = vpop.f32.mrf.mxu0
    %834 = vmatprep.mubr.f32.mxu0 %v671
    %835 = vmatmul.mubr.f32.gmra.mxu0 %v663
    %v836 = vpop.f32.mrf.mxu0
    %v837 = vadd.f32 %v733, %v836
    %v838 = vpop.f32.mrf.mxu0
    %839 = vdwg.mxu0
    %840 = vmatprep.subr.mxu0 0.0
    %841 = vmatpush1.msra.mxu0 %v727
    %842 = vmatprep.subr.mxu0 0.0
    %843 = vmatpush1.msra.mxu0 %v726
    %844 = vmatprep.subr.mxu0 0.0
    %845 = vmatpush1.msra.mxu0 %v725
    %846 = vmatprep.subr.mxu0 0.0
    %847 = vmatpush1.msra.mxu0 %v724
    %848 = vmatprep.subr.mxu0 0.0
    %849 = vmatpush1.msra.mxu0 %v723
    %850 = vmatprep.subr.mxu0 0.0
    %851 = vmatpush1.msra.mxu0 %v722
    %852 = vmatprep.subr.mxu0 0.0
    %853 = vmatpush1.msra.mxu0 %v721
    %854 = vmatprep.subr.mxu0 0.0
    %855 = vmatpush1.msra.mxu0 %v720
    %856 = vmatprep.subr.mxu0 0.0
    %857 = vmatpush1.msra.mxu0 %v719
    %858 = vmatprep.subr.mxu0 0.0
    %859 = vmatpush1.msra.mxu0 %v718
    %860 = vmatprep.subr.mxu0 0.0
    %861 = vmatpush1.msra.mxu0 %v717
    %862 = vmatprep.subr.mxu0 0.0
    %863 = vmatpush1.msra.mxu0 %v716
    %864 = vmatprep.subr.mxu0 0.0
    %865 = vmatpush1.msra.mxu0 %v715
    %866 = vmatprep.subr.mxu0 0.0
    %867 = vmatpush1.msra.mxu0 %v714
    %868 = vmatprep.subr.mxu0 0.0
    %869 = vmatpush1.msra.mxu0 %v713
    %870 = vmatprep.subr.mxu0 0.0
    %871 = vmatpush1.msra.mxu0 %v712
    %872 = vmatprep.subr.mxu0 0.0
    %873 = vmatpush2.msra.mxu0 0.0
    %874 = vmatprep.subr.mxu0 0.0
    %875 = vmatpush2.msra.mxu0 0.0
    %876 = vmatprep.subr.mxu0 0.0
    %877 = vmatpush2.msra.mxu0 0.0
    %878 = vmatprep.subr.mxu0 0.0
    %879 = vmatpush2.msra.mxu0 0.0
    %880 = vmatprep.subr.mxu0 0.0
    %881 = vmatpush2.msra.mxu0 0.0
    %882 = vmatprep.subr.mxu0 0.0
    %883 = vmatpush2.msra.mxu0 0.0
    %884 = vmatprep.subr.mxu0 0.0
    %885 = vmatpush2.msra.mxu0 0.0
    %886 = vmatprep.subr.mxu0 0.0
    %887 = vmatpush2.msra.mxu0 0.0
    %888 = vmatprep.subr.mxu0 0.0
    %889 = vmatpush2.msra.mxu0 0.0
    %890 = vmatprep.subr.mxu0 0.0
    %891 = vmatpush2.msra.mxu0 0.0
    %892 = vmatprep.subr.mxu0 0.0
    %893 = vmatpush2.msra.mxu0 0.0
    %894 = vmatprep.subr.mxu0 0.0
    %895 = vmatpush2.msra.mxu0 0.0
    %896 = vmatprep.subr.mxu0 0.0
    %897 = vmatpush2.msra.mxu0 0.0
    %898 = vmatprep.subr.mxu0 0.0
    %899 = vmatpush2.msra.mxu0 0.0
    %900 = vmatprep.subr.mxu0 0.0
    %901 = vmatpush2.msra.mxu0 0.0
    %902 = vmatprep.subr.mxu0 0.0
    %903 = vmatpush2.msra.mxu0 0.0
    %904 = vmatprep.mubr.f32.mxu0 0.0
    %905 = vmatmul.mubr.f32.gmra.mxu0 %v672
    %v906 = vpop.f32.mrf.mxu0
    %v907 = vadd.f32 %v802, %v906
    %v908 = vpop.f32.mrf.mxu0
    %909 = vmatprep.mubr.f32.mxu0 0.0
    %910 = vmatmul.mubr.f32.gmra.mxu0 %v673
    %v911 = vpop.f32.mrf.mxu0
    %v912 = vadd.f32 %v807, %v911
    %v913 = vpop.f32.mrf.mxu0
    %914 = vmatprep.mubr.f32.mxu0 0.0
    %915 = vmatmul.mubr.f32.gmra.mxu0 %v674
    %v916 = vpop.f32.mrf.mxu0
    %v917 = vadd.f32 %v812, %v916
    %v918 = vpop.f32.mrf.mxu0
    %919 = vmatprep.mubr.f32.mxu0 0.0
    %920 = vmatmul.mubr.f32.gmra.mxu0 %v675
    %v921 = vpop.f32.mrf.mxu0
    %v922 = vadd.f32 %v817, %v921
    %v923 = vpop.f32.mrf.mxu0
    %924 = vmatprep.mubr.f32.mxu0 0.0
    %925 = vmatmul.mubr.f32.gmra.mxu0 %v676
    %v926 = vpop.f32.mrf.mxu0
    %v927 = vadd.f32 %v822, %v926
    %v928 = vpop.f32.mrf.mxu0
    %929 = vmatprep.mubr.f32.mxu0 0.0
    %930 = vmatmul.mubr.f32.gmra.mxu0 %v677
    %v931 = vpop.f32.mrf.mxu0
    %v932 = vadd.f32 %v827, %v931
    %v933 = vpop.f32.mrf.mxu0
    %934 = vmatprep.mubr.f32.mxu0 0.0
    %935 = vmatmul.mubr.f32.gmra.mxu0 %v678
    %v936 = vpop.f32.mrf.mxu0
    %v937 = vadd.f32 %v832, %v936
    %v938 = vpop.f32.mrf.mxu0
    %939 = vmatprep.mubr.f32.mxu0 0.0
    %940 = vmatmul.mubr.f32.gmra.mxu0 %v679
    %v941 = vpop.f32.mrf.mxu0
    %v942 = vadd.f32 %v837, %v941
    %v943 = vpop.f32.mrf.mxu0
    %944 = vdwg.mxu0
    %v945 = vmul.f32 %v907, 0.01
    %v946 = vmul.f32 %v912, 0.01
    %v947 = vmul.f32 %v917, 0.01
    %v948 = vmul.f32 %v922, 0.01
    %v949 = vmul.f32 %v927, 0.01
    %v950 = vmul.f32 %v932, 0.01
    %v951 = vmul.f32 %v937, 0.01
    %v952 = vmul.f32 %v942, 0.01
    %v953 = vmax.f32 %v907, %v945
    %v954 = vmax.f32 %v912, %v946
    %v955 = vmax.f32 %v917, %v947
    %v956 = vmax.f32 %v922, %v948
    %v957 = vmax.f32 %v927, %v949
    %v958 = vmax.f32 %v932, %v950
    %v959 = vmax.f32 %v937, %v951
    %v960 = vmax.f32 %v942, %v952
    %v961 = vrot.slane %v953, 1
    %v962 = vrot.slane %v954, 1
    %v963 = vrot.slane %v955, 1
    %v964 = vrot.slane %v956, 1
    %v965 = vrot.slane %v957, 1
    %v966 = vrot.slane %v958, 1
    %v967 = vrot.slane %v959, 1
    %v968 = vrot.slane %v960, 1
    %v969 = vsel %vm329, %v967, %v968
    %v970 = vsel %vm329, %v966, %v967
    %v971 = vsel %vm329, %v965, %v966
    %v972 = vsel %vm329, %v964, %v965
    %v973 = vsel %vm329, %v963, %v964
    %v974 = vsel %vm329, %v962, %v963
    %v975 = vsel %vm329, %v961, %v962
    %v976 = vsel %vm329, %v968, %v961
    %v977 = vmax.f32 %v953, %v975
    %v978 = vmax.f32 %v954, %v974
    %v979 = vmax.f32 %v955, %v973
    %v980 = vmax.f32 %v956, %v972
    %v981 = vmax.f32 %v957, %v971
    %v982 = vmax.f32 %v958, %v970
    %v983 = vmax.f32 %v959, %v969
    %v984 = vmax.f32 %v960, %v976
    %v985 = vld [vmem:[%s6] sm:$0xff]
    %v986 = vld [vmem:[%s6 + $0x8] sm:$0xff]
    %v987 = vld [vmem:[%s6 + $0x10] sm:$0xff]
    %v988 = vld [vmem:[%s6 + $0x18] sm:$0xff]
    %v990 = vsel %vm655, %v985, 0
    %v993 = vsel %vm655, %v986, 0
    %v996 = vsel %vm655, %v987, 0
    %v999 = vsel %vm655, %v988, 0
    %1001 = vmatprep.subr.mxu0 0.0
    %1002 = vmatpush1.msra.mxu0 0.0
    %1003 = vmatprep.subr.mxu0 0.0
    %1004 = vmatpush1.msra.mxu0 0.0
    %1005 = vmatprep.subr.mxu0 0.0
    %1006 = vmatpush1.msra.mxu0 0.0
    %1007 = vmatprep.subr.mxu0 0.0
    %1008 = vmatpush1.msra.mxu0 0.0
    %1009 = vmatprep.subr.mxu0 0.0
    %1010 = vmatpush1.msra.mxu0 0.0
    %1011 = vmatprep.subr.mxu0 0.0
    %1012 = vmatpush1.msra.mxu0 0.0
    %1013 = vmatprep.subr.mxu0 0.0
    %1014 = vmatpush1.msra.mxu0 0.0
    %1015 = vmatprep.subr.mxu0 0.0
    %1016 = vmatpush1.msra.mxu0 0.0
    %1017 = vmatprep.subr.mxu0 0.0
    %1018 = vmatpush1.msra.mxu0 %v984
    %1019 = vmatprep.subr.mxu0 0.0
    %1020 = vmatpush1.msra.mxu0 %v983
    %1021 = vmatprep.subr.mxu0 0.0
    %1022 = vmatpush1.msra.mxu0 %v982
    %1023 = vmatprep.subr.mxu0 0.0
    %1024 = vmatpush1.msra.mxu0 %v981
    %1025 = vmatprep.subr.mxu0 0.0
    %1026 = vmatpush1.msra.mxu0 %v980
    %1027 = vmatprep.subr.mxu0 0.0
    %1028 = vmatpush1.msra.mxu0 %v979
    %1029 = vmatprep.subr.mxu0 0.0
    %1030 = vmatpush1.msra.mxu0 %v978
    %1031 = vmatprep.subr.mxu0 0.0
    %1032 = vmatpush1.msra.mxu0 %v977
    %1033 = vmatprep.subr.mxu0 0.0
    %1034 = vmatpush2.msra.mxu0 0.0
    %1035 = vmatprep.subr.mxu0 0.0
    %1036 = vmatpush2.msra.mxu0 0.0
    %1037 = vmatprep.subr.mxu0 0.0
    %1038 = vmatpush2.msra.mxu0 0.0
    %1039 = vmatprep.subr.mxu0 0.0
    %1040 = vmatpush2.msra.mxu0 0.0
    %1041 = vmatprep.subr.mxu0 0.0
    %1042 = vmatpush2.msra.mxu0 0.0
    %1043 = vmatprep.subr.mxu0 0.0
    %1044 = vmatpush2.msra.mxu0 0.0
    %1045 = vmatprep.subr.mxu0 0.0
    %1046 = vmatpush2.msra.mxu0 0.0
    %1047 = vmatprep.subr.mxu0 0.0
    %1048 = vmatpush2.msra.mxu0 0.0
    %1049 = vmatprep.subr.mxu0 0.0
    %1050 = vmatpush2.msra.mxu0 0.0
    %1051 = vmatprep.subr.mxu0 0.0
    %1052 = vmatpush2.msra.mxu0 0.0
    %1053 = vmatprep.subr.mxu0 0.0
    %1054 = vmatpush2.msra.mxu0 0.0
    %1055 = vmatprep.subr.mxu0 0.0
    %1056 = vmatpush2.msra.mxu0 0.0
    %1057 = vmatprep.subr.mxu0 0.0
    %1058 = vmatpush2.msra.mxu0 0.0
    %1059 = vmatprep.subr.mxu0 0.0
    %1060 = vmatpush2.msra.mxu0 0.0
    %1061 = vmatprep.subr.mxu0 0.0
    %1062 = vmatpush2.msra.mxu0 0.0
    %1063 = vmatprep.subr.mxu0 0.0
    %1064 = vmatpush2.msra.mxu0 0.0
    %1065 = vmatprep.mubr.f32.mxu0 0.0
    %1066 = vmatmul.mubr.f32.gmra.mxu0 %v990
    %v1067 = vpop.f32.mrf.mxu0
    %v1068 = vadd.f32 0.0, %v1067
    %v1069 = vpop.f32.mrf.mxu0
    %1070 = vmatprep.mubr.f32.mxu0 0.0
    %1071 = vmatmul.mubr.f32.gmra.mxu0 %v993
    %v1072 = vpop.f32.mrf.mxu0
    %v1073 = vadd.f32 0.0, %v1072
    %v1074 = vpop.f32.mrf.mxu0
    %1075 = vmatprep.mubr.f32.mxu0 0.0
    %1076 = vmatmul.mubr.f32.gmra.mxu0 %v996
    %v1077 = vpop.f32.mrf.mxu0
    %v1078 = vadd.f32 0.0, %v1077
    %v1079 = vpop.f32.mrf.mxu0
    %1080 = vmatprep.mubr.f32.mxu0 0.0
    %1081 = vmatmul.mubr.f32.gmra.mxu0 %v999
    %v1082 = vpop.f32.mrf.mxu0
    %v1083 = vadd.f32 0.0, %v1082
    %v1084 = vpop.f32.mrf.mxu0
    %1085 = vdwg.mxu0
    %v1086 = vrot.slane %v1068, 1
    %v1087 = vrot.slane %v1073, 1
    %v1088 = vrot.slane %v1078, 1
    %v1089 = vrot.slane %v1083, 1
    %v1090 = vsel %vm329, %v1088, %v1089
    %v1091 = vsel %vm329, %v1087, %v1088
    %v1092 = vsel %vm329, %v1086, %v1087
    %v1093 = vsel %vm329, %v1089, %v1086
    %v1094 = vrot.slane %v1068, 2
    %v1095 = vrot.slane %v1073, 2
    %v1096 = vrot.slane %v1078, 2
    %v1097 = vrot.slane %v1083, 2
    %v1098 = vsel %vm499, %v1096, %v1097
    %v1099 = vsel %vm499, %v1095, %v1096
    %v1100 = vsel %vm499, %v1094, %v1095
    %v1101 = vsel %vm499, %v1097, %v1094
    %v1102 = vrot.slane %v1068, 3
    %v1103 = vrot.slane %v1073, 3
    %v1104 = vrot.slane %v1078, 3
    %v1105 = vrot.slane %v1083, 3
    %v1106 = vsel %vm516, %v1104, %v1105
    %v1107 = vsel %vm516, %v1103, %v1104
    %v1108 = vsel %vm516, %v1102, %v1103
    %v1109 = vsel %vm516, %v1105, %v1102
    %v1110 = vrot.slane %v1068, 4
    %v1111 = vrot.slane %v1073, 4
    %v1112 = vrot.slane %v1078, 4
    %v1113 = vrot.slane %v1083, 4
    %v1114 = vsel %vm533, %v1112, %v1113
    %v1115 = vsel %vm533, %v1111, %v1112
    %v1116 = vsel %vm533, %v1110, %v1111
    %v1117 = vsel %vm533, %v1113, %v1110
    %v1118 = vld [vmem:[%s7] sm:$0xff]
    %v1119 = vld [vmem:[%s7 + $0x8] sm:$0xff]
    %v1120 = vld [vmem:[%s7 + $0x10] sm:$0xff]
    %v1121 = vld [vmem:[%s7 + $0x18] sm:$0xff]
    %v1122 = vld [vmem:[%s7 + $0x20] sm:$0xff]
    %v1123 = vld [vmem:[%s7 + $0x28] sm:$0xff]
    %v1124 = vld [vmem:[%s7 + $0x30] sm:$0xff]
    %v1125 = vld [vmem:[%s7 + $0x38] sm:$0xff]
    %v1126 = vld [vmem:[%s7 + $0x40] sm:$0xff]
    %v1127 = vld [vmem:[%s7 + $0x48] sm:$0xff]
    %v1128 = vld [vmem:[%s7 + $0x50] sm:$0xff]
    %v1129 = vld [vmem:[%s7 + $0x58] sm:$0xff]
    %v1130 = vld [vmem:[%s7 + $0x60] sm:$0xff]
    %v1131 = vld [vmem:[%s7 + $0x68] sm:$0xff]
    %v1132 = vld [vmem:[%s7 + $0x70] sm:$0xff]
    %v1133 = vld [vmem:[%s7 + $0x78] sm:$0xff]
    %v1134 = vld [vmem:[%s7 + $0x80] sm:$0xff]
    %v1135 = vld [vmem:[%s7 + $0x88] sm:$0xff]
    %v1136 = vld [vmem:[%s7 + $0x90] sm:$0xff]
    %v1137 = vld [vmem:[%s7 + $0x98] sm:$0xff]
    %v1138 = vld [vmem:[%s7 + $0xa0] sm:$0xff]
    %v1139 = vld [vmem:[%s7 + $0xa8] sm:$0xff]
    %v1140 = vld [vmem:[%s7 + $0xb0] sm:$0xff]
    %v1141 = vld [vmem:[%s7 + $0xb8] sm:$0xff]
    %v1142 = vld [vmem:[%s7 + $0xc0] sm:$0xff]
    %v1143 = vld [vmem:[%s7 + $0xc8] sm:$0xff]
    %v1144 = vld [vmem:[%s7 + $0xd0] sm:$0xff]
    %v1145 = vld [vmem:[%s7 + $0xd8] sm:$0xff]
    %v1146 = vld [vmem:[%s7 + $0xe0] sm:$0xff]
    %v1147 = vld [vmem:[%s7 + $0xe8] sm:$0xff]
    %v1148 = vld [vmem:[%s7 + $0xf0] sm:$0xff]
    %v1149 = vld [vmem:[%s7 + $0xf8] sm:$0xff]
    %v1150 = vld [vmem:[%s7 + $0x100] sm:$0xff]
    %v1151 = vld [vmem:[%s7 + $0x108] sm:$0xff]
    %v1152 = vld [vmem:[%s7 + $0x110] sm:$0xff]
    %v1153 = vld [vmem:[%s7 + $0x118] sm:$0xff]
    %v1154 = vld [vmem:[%s7 + $0x120] sm:$0xff]
    %v1155 = vld [vmem:[%s7 + $0x128] sm:$0xff]
    %v1156 = vld [vmem:[%s7 + $0x130] sm:$0xff]
    %v1157 = vld [vmem:[%s7 + $0x138] sm:$0xff]
    %v1158 = vld [vmem:[%s7 + $0x140] sm:$0xff]
    %v1159 = vld [vmem:[%s7 + $0x148] sm:$0xff]
    %v1160 = vld [vmem:[%s7 + $0x150] sm:$0xff]
    %v1161 = vld [vmem:[%s7 + $0x158] sm:$0xff]
    %v1162 = vld [vmem:[%s7 + $0x160] sm:$0xff]
    %v1163 = vld [vmem:[%s7 + $0x168] sm:$0xff]
    %v1164 = vld [vmem:[%s7 + $0x170] sm:$0xff]
    %v1165 = vld [vmem:[%s7 + $0x178] sm:$0xff]
    %v1166 = vld [vmem:[%s7 + $0x180] sm:$0xff]
    %v1167 = vld [vmem:[%s7 + $0x188] sm:$0xff]
    %v1168 = vld [vmem:[%s7 + $0x190] sm:$0xff]
    %v1169 = vld [vmem:[%s7 + $0x198] sm:$0xff]
    %v1170 = vld [vmem:[%s7 + $0x1a0] sm:$0xff]
    %v1171 = vld [vmem:[%s7 + $0x1a8] sm:$0xff]
    %v1172 = vld [vmem:[%s7 + $0x1b0] sm:$0xff]
    %v1173 = vld [vmem:[%s7 + $0x1b8] sm:$0xff]
    %v1174 = vld [vmem:[%s7 + $0x1c0] sm:$0xff]
    %v1175 = vld [vmem:[%s7 + $0x1c8] sm:$0xff]
    %v1176 = vld [vmem:[%s7 + $0x1d0] sm:$0xff]
    %v1177 = vld [vmem:[%s7 + $0x1d8] sm:$0xff]
    %v1178 = vld [vmem:[%s7 + $0x1e0] sm:$0xff]
    %v1179 = vld [vmem:[%s7 + $0x1e8] sm:$0xff]
    %v1180 = vld [vmem:[%s7 + $0x1f0] sm:$0xff]
    %v1181 = vld [vmem:[%s7 + $0x1f8] sm:$0xff]
    %v1182 = vld [vmem:[%s7 + $0x200] sm:$0xff]
    %v1183 = vld [vmem:[%s7 + $0x208] sm:$0xff]
    %v1184 = vld [vmem:[%s7 + $0x210] sm:$0xff]
    %v1185 = vld [vmem:[%s7 + $0x218] sm:$0xff]
    %v1186 = vld [vmem:[%s7 + $0x220] sm:$0xff]
    %v1187 = vld [vmem:[%s7 + $0x228] sm:$0xff]
    %v1188 = vld [vmem:[%s7 + $0x230] sm:$0xff]
    %v1189 = vld [vmem:[%s7 + $0x238] sm:$0xff]
    %v1190 = vld [vmem:[%s7 + $0x240] sm:$0xff]
    %v1191 = vld [vmem:[%s7 + $0x248] sm:$0xff]
    %v1192 = vld [vmem:[%s7 + $0x250] sm:$0xff]
    %v1193 = vld [vmem:[%s7 + $0x258] sm:$0xff]
    %v1194 = vld [vmem:[%s7 + $0x260] sm:$0xff]
    %v1195 = vld [vmem:[%s7 + $0x268] sm:$0xff]
    %v1196 = vld [vmem:[%s7 + $0x270] sm:$0xff]
    %v1197 = vld [vmem:[%s7 + $0x278] sm:$0xff]
    %v1198 = vld [vmem:[%s8] sm:$0x1]
    %v1200 = vlaneseq
    %v1201 = vshrl.u32 %v1200, 7
    %v1202 = vsub.s32 0, %v1201
    %v1203 = vrot.slane %v1198, %v1202
    %1205 = vmatprep.subr.mxu0 0.0
    %1206 = vmatpush1.msra.mxu0 %v1133
    %1207 = vmatprep.subr.mxu0 0.0
    %1208 = vmatpush1.msra.mxu0 %v1132
    %1209 = vmatprep.subr.mxu0 0.0
    %1210 = vmatpush1.msra.mxu0 %v1131
    %1211 = vmatprep.subr.mxu0 0.0
    %1212 = vmatpush1.msra.mxu0 %v1130
    %1213 = vmatprep.subr.mxu0 0.0
    %1214 = vmatpush1.msra.mxu0 %v1129
    %1215 = vmatprep.subr.mxu0 0.0
    %1216 = vmatpush1.msra.mxu0 %v1128
    %1217 = vmatprep.subr.mxu0 0.0
    %1218 = vmatpush1.msra.mxu0 %v1127
    %1219 = vmatprep.subr.mxu0 0.0
    %1220 = vmatpush1.msra.mxu0 %v1126
    %1221 = vmatprep.subr.mxu0 0.0
    %1222 = vmatpush1.msra.mxu0 %v1125
    %1223 = vmatprep.subr.mxu0 0.0
    %1224 = vmatpush1.msra.mxu0 %v1124
    %1225 = vmatprep.subr.mxu0 0.0
    %1226 = vmatpush1.msra.mxu0 %v1123
    %1227 = vmatprep.subr.mxu0 0.0
    %1228 = vmatpush1.msra.mxu0 %v1122
    %1229 = vmatprep.subr.mxu0 0.0
    %1230 = vmatpush1.msra.mxu0 %v1121
    %1231 = vmatprep.subr.mxu0 0.0
    %1232 = vmatpush1.msra.mxu0 %v1120
    %1233 = vmatprep.subr.mxu0 0.0
    %1234 = vmatpush1.msra.mxu0 %v1119
    %1235 = vmatprep.subr.mxu0 0.0
    %1236 = vmatpush1.msra.mxu0 %v1118
    %1237 = vmatprep.subr.mxu0 0.0
    %1238 = vmatpush2.msra.mxu0 %v1149
    %1239 = vmatprep.subr.mxu0 0.0
    %1240 = vmatpush2.msra.mxu0 %v1148
    %1241 = vmatprep.subr.mxu0 0.0
    %1242 = vmatpush2.msra.mxu0 %v1147
    %1243 = vmatprep.subr.mxu0 0.0
    %1244 = vmatpush2.msra.mxu0 %v1146
    %1245 = vmatprep.subr.mxu0 0.0
    %1246 = vmatpush2.msra.mxu0 %v1145
    %1247 = vmatprep.subr.mxu0 0.0
    %1248 = vmatpush2.msra.mxu0 %v1144
    %1249 = vmatprep.subr.mxu0 0.0
    %1250 = vmatpush2.msra.mxu0 %v1143
    %1251 = vmatprep.subr.mxu0 0.0
    %1252 = vmatpush2.msra.mxu0 %v1142
    %1253 = vmatprep.subr.mxu0 0.0
    %1254 = vmatpush2.msra.mxu0 %v1141
    %1255 = vmatprep.subr.mxu0 0.0
    %1256 = vmatpush2.msra.mxu0 %v1140
    %1257 = vmatprep.subr.mxu0 0.0
    %1258 = vmatpush2.msra.mxu0 %v1139
    %1259 = vmatprep.subr.mxu0 0.0
    %1260 = vmatpush2.msra.mxu0 %v1138
    %1261 = vmatprep.subr.mxu0 0.0
    %1262 = vmatpush2.msra.mxu0 %v1137
    %1263 = vmatprep.subr.mxu0 0.0
    %1264 = vmatpush2.msra.mxu0 %v1136
    %1265 = vmatprep.subr.mxu0 0.0
    %1266 = vmatpush2.msra.mxu0 %v1135
    %1267 = vmatprep.subr.mxu0 0.0
    %1268 = vmatpush2.msra.mxu0 %v1134
    %1269 = vmatprep.mubr.f32.mxu0 %v1092
    %1270 = vmatmul.mubr.f32.gmra.mxu0 %v1068
    %v1271 = vpop.f32.mrf.mxu0
    %v1272 = vadd.f32 %v1203, %v1271
    %v1273 = vpop.f32.mrf.mxu0
    %1274 = vmatprep.mubr.f32.mxu0 %v1091
    %1275 = vmatmul.mubr.f32.gmra.mxu0 %v1073
    %v1276 = vpop.f32.mrf.mxu0
    %v1277 = vadd.f32 %v1203, %v1276
    %v1278 = vpop.f32.mrf.mxu0
    %1279 = vmatprep.mubr.f32.mxu0 %v1090
    %1280 = vmatmul.mubr.f32.gmra.mxu0 %v1078
    %v1281 = vpop.f32.mrf.mxu0
    %v1282 = vadd.f32 %v1203, %v1281
    %v1283 = vpop.f32.mrf.mxu0
    %1284 = vmatprep.mubr.f32.mxu0 %v1093
    %1285 = vmatmul.mubr.f32.gmra.mxu0 %v1083
    %v1286 = vpop.f32.mrf.mxu0
    %v1287 = vadd.f32 %v1203, %v1286
    %v1288 = vpop.f32.mrf.mxu0
    %1289 = vdwg.mxu0
    %1290 = vmatprep.subr.mxu0 0.0
    %1291 = vmatpush1.msra.mxu0 %v1165
    %1292 = vmatprep.subr.mxu0 0.0
    %1293 = vmatpush1.msra.mxu0 %v1164
    %1294 = vmatprep.subr.mxu0 0.0
    %1295 = vmatpush1.msra.mxu0 %v1163
    %1296 = vmatprep.subr.mxu0 0.0
    %1297 = vmatpush1.msra.mxu0 %v1162
    %1298 = vmatprep.subr.mxu0 0.0
    %1299 = vmatpush1.msra.mxu0 %v1161
    %1300 = vmatprep.subr.mxu0 0.0
    %1301 = vmatpush1.msra.mxu0 %v1160
    %1302 = vmatprep.subr.mxu0 0.0
    %1303 = vmatpush1.msra.mxu0 %v1159
    %1304 = vmatprep.subr.mxu0 0.0
    %1305 = vmatpush1.msra.mxu0 %v1158
    %1306 = vmatprep.subr.mxu0 0.0
    %1307 = vmatpush1.msra.mxu0 %v1157
    %1308 = vmatprep.subr.mxu0 0.0
    %1309 = vmatpush1.msra.mxu0 %v1156
    %1310 = vmatprep.subr.mxu0 0.0
    %1311 = vmatpush1.msra.mxu0 %v1155
    %1312 = vmatprep.subr.mxu0 0.0
    %1313 = vmatpush1.msra.mxu0 %v1154
    %1314 = vmatprep.subr.mxu0 0.0
    %1315 = vmatpush1.msra.mxu0 %v1153
    %1316 = vmatprep.subr.mxu0 0.0
    %1317 = vmatpush1.msra.mxu0 %v1152
    %1318 = vmatprep.subr.mxu0 0.0
    %1319 = vmatpush1.msra.mxu0 %v1151
    %1320 = vmatprep.subr.mxu0 0.0
    %1321 = vmatpush1.msra.mxu0 %v1150
    %1322 = vmatprep.subr.mxu0 0.0
    %1323 = vmatpush2.msra.mxu0 %v1181
    %1324 = vmatprep.subr.mxu0 0.0
    %1325 = vmatpush2.msra.mxu0 %v1180
    %1326 = vmatprep.subr.mxu0 0.0
    %1327 = vmatpush2.msra.mxu0 %v1179
    %1328 = vmatprep.subr.mxu0 0.0
    %1329 = vmatpush2.msra.mxu0 %v1178
    %1330 = vmatprep.subr.mxu0 0.0
    %1331 = vmatpush2.msra.mxu0 %v1177
    %1332 = vmatprep.subr.mxu0 0.0
    %1333 = vmatpush2.msra.mxu0 %v1176
    %1334 = vmatprep.subr.mxu0 0.0
    %1335 = vmatpush2.msra.mxu0 %v1175
    %1336 = vmatprep.subr.mxu0 0.0
    %1337 = vmatpush2.msra.mxu0 %v1174
    %1338 = vmatprep.subr.mxu0 0.0
    %1339 = vmatpush2.msra.mxu0 %v1173
    %1340 = vmatprep.subr.mxu0 0.0
    %1341 = vmatpush2.msra.mxu0 %v1172
    %1342 = vmatprep.subr.mxu0 0.0
    %1343 = vmatpush2.msra.mxu0 %v1171
    %1344 = vmatprep.subr.mxu0 0.0
    %1345 = vmatpush2.msra.mxu0 %v1170
    %1346 = vmatprep.subr.mxu0 0.0
    %1347 = vmatpush2.msra.mxu0 %v1169
    %1348 = vmatprep.subr.mxu0 0.0
    %1349 = vmatpush2.msra.mxu0 %v1168
    %1350 = vmatprep.subr.mxu0 0.0
    %1351 = vmatpush2.msra.mxu0 %v1167
    %1352 = vmatprep.subr.mxu0 0.0
    %1353 = vmatpush2.msra.mxu0 %v1166
    %1354 = vmatprep.mubr.f32.mxu0 %v1108
    %1355 = vmatmul.mubr.f32.gmra.mxu0 %v1100
    %v1356 = vpop.f32.mrf.mxu0
    %v1357 = vadd.f32 %v1272, %v1356
    %v1358 = vpop.f32.mrf.mxu0
    %1359 = vmatprep.mubr.f32.mxu0 %v1107
    %1360 = vmatmul.mubr.f32.gmra.mxu0 %v1099
    %v1361 = vpop.f32.mrf.mxu0
    %v1362 = vadd.f32 %v1277, %v1361
    %v1363 = vpop.f32.mrf.mxu0
    %1364 = vmatprep.mubr.f32.mxu0 %v1106
    %1365 = vmatmul.mubr.f32.gmra.mxu0 %v1098
    %v1366 = vpop.f32.mrf.mxu0
    %v1367 = vadd.f32 %v1282, %v1366
    %v1368 = vpop.f32.mrf.mxu0
    %1369 = vmatprep.mubr.f32.mxu0 %v1109
    %1370 = vmatmul.mubr.f32.gmra.mxu0 %v1101
    %v1371 = vpop.f32.mrf.mxu0
    %v1372 = vadd.f32 %v1287, %v1371
    %v1373 = vpop.f32.mrf.mxu0
    %1374 = vdwg.mxu0
    %1375 = vmatprep.subr.mxu0 0.0
    %1376 = vmatpush1.msra.mxu0 %v1197
    %1377 = vmatprep.subr.mxu0 0.0
    %1378 = vmatpush1.msra.mxu0 %v1196
    %1379 = vmatprep.subr.mxu0 0.0
    %1380 = vmatpush1.msra.mxu0 %v1195
    %1381 = vmatprep.subr.mxu0 0.0
    %1382 = vmatpush1.msra.mxu0 %v1194
    %1383 = vmatprep.subr.mxu0 0.0
    %1384 = vmatpush1.msra.mxu0 %v1193
    %1385 = vmatprep.subr.mxu0 0.0
    %1386 = vmatpush1.msra.mxu0 %v1192
    %1387 = vmatprep.subr.mxu0 0.0
    %1388 = vmatpush1.msra.mxu0 %v1191
    %1389 = vmatprep.subr.mxu0 0.0
    %1390 = vmatpush1.msra.mxu0 %v1190
    %1391 = vmatprep.subr.mxu0 0.0
    %1392 = vmatpush1.msra.mxu0 %v1189
    %1393 = vmatprep.subr.mxu0 0.0
    %1394 = vmatpush1.msra.mxu0 %v1188
    %1395 = vmatprep.subr.mxu0 0.0
    %1396 = vmatpush1.msra.mxu0 %v1187
    %1397 = vmatprep.subr.mxu0 0.0
    %1398 = vmatpush1.msra.mxu0 %v1186
    %1399 = vmatprep.subr.mxu0 0.0
    %1400 = vmatpush1.msra.mxu0 %v1185
    %1401 = vmatprep.subr.mxu0 0.0
    %1402 = vmatpush1.msra.mxu0 %v1184
    %1403 = vmatprep.subr.mxu0 0.0
    %1404 = vmatpush1.msra.mxu0 %v1183
    %1405 = vmatprep.subr.mxu0 0.0
    %1406 = vmatpush1.msra.mxu0 %v1182
    %1407 = vmatprep.subr.mxu0 0.0
    %1408 = vmatpush2.msra.mxu0 0.0
    %1409 = vmatprep.subr.mxu0 0.0
    %1410 = vmatpush2.msra.mxu0 0.0
    %1411 = vmatprep.subr.mxu0 0.0
    %1412 = vmatpush2.msra.mxu0 0.0
    %1413 = vmatprep.subr.mxu0 0.0
    %1414 = vmatpush2.msra.mxu0 0.0
    %1415 = vmatprep.subr.mxu0 0.0
    %1416 = vmatpush2.msra.mxu0 0.0
    %1417 = vmatprep.subr.mxu0 0.0
    %1418 = vmatpush2.msra.mxu0 0.0
    %1419 = vmatprep.subr.mxu0 0.0
    %1420 = vmatpush2.msra.mxu0 0.0
    %1421 = vmatprep.subr.mxu0 0.0
    %1422 = vmatpush2.msra.mxu0 0.0
    %1423 = vmatprep.subr.mxu0 0.0
    %1424 = vmatpush2.msra.mxu0 0.0
    %1425 = vmatprep.subr.mxu0 0.0
    %1426 = vmatpush2.msra.mxu0 0.0
    %1427 = vmatprep.subr.mxu0 0.0
    %1428 = vmatpush2.msra.mxu0 0.0
    %1429 = vmatprep.subr.mxu0 0.0
    %1430 = vmatpush2.msra.mxu0 0.0
    %1431 = vmatprep.subr.mxu0 0.0
    %1432 = vmatpush2.msra.mxu0 0.0
    %1433 = vmatprep.subr.mxu0 0.0
    %1434 = vmatpush2.msra.mxu0 0.0
    %1435 = vmatprep.subr.mxu0 0.0
    %1436 = vmatpush2.msra.mxu0 0.0
    %1437 = vmatprep.subr.mxu0 0.0
    %1438 = vmatpush2.msra.mxu0 0.0
    %1439 = vmatprep.mubr.f32.mxu0 0.0
    %1440 = vmatmul.mubr.f32.gmra.mxu0 %v1116
    %v1441 = vpop.f32.mrf.mxu0
    %v1442 = vadd.f32 %v1357, %v1441
    %v1443 = vpop.f32.mrf.mxu0
    %1444 = vmatprep.mubr.f32.mxu0 0.0
    %1445 = vmatmul.mubr.f32.gmra.mxu0 %v1115
    %v1446 = vpop.f32.mrf.mxu0
    %v1447 = vadd.f32 %v1362, %v1446
    %v1448 = vpop.f32.mrf.mxu0
    %1449 = vmatprep.mubr.f32.mxu0 0.0
    %1450 = vmatmul.mubr.f32.gmra.mxu0 %v1114
    %v1451 = vpop.f32.mrf.mxu0
    %v1452 = vadd.f32 %v1367, %v1451
    %v1453 = vpop.f32.mrf.mxu0
    %1454 = vmatprep.mubr.f32.mxu0 0.0
    %1455 = vmatmul.mubr.f32.gmra.mxu0 %v1117
    %v1456 = vpop.f32.mrf.mxu0
    %v1457 = vadd.f32 %v1372, %v1456
    %v1458 = vpop.f32.mrf.mxu0
    %1459 = vdwg.mxu0
    %v1460 = vmul.f32 %v1442, 0.01
    %v1461 = vmul.f32 %v1447, 0.01
    %v1462 = vmul.f32 %v1452, 0.01
    %v1463 = vmul.f32 %v1457, 0.01
    %v1464 = vmax.f32 %v1442, %v1460
    %v1465 = vmax.f32 %v1447, %v1461
    %v1466 = vmax.f32 %v1452, %v1462
    %v1467 = vmax.f32 %v1457, %v1463
    %v1468 = vrot.slane %v1464, 1
    %v1469 = vrot.slane %v1465, 1
    %v1470 = vrot.slane %v1466, 1
    %v1471 = vrot.slane %v1467, 1
    %v1472 = vsel %vm329, %v1470, %v1471
    %v1473 = vsel %vm329, %v1469, %v1470
    %v1474 = vsel %vm329, %v1468, %v1469
    %v1475 = vsel %vm329, %v1471, %v1468
    %v1476 = vrot.slane %v1464, 2
    %v1477 = vrot.slane %v1465, 2
    %v1478 = vrot.slane %v1466, 2
    %v1479 = vrot.slane %v1467, 2
    %v1480 = vsel %vm499, %v1478, %v1479
    %v1481 = vsel %vm499, %v1477, %v1478
    %v1482 = vsel %vm499, %v1476, %v1477
    %v1483 = vsel %vm499, %v1479, %v1476
    %v1484 = vrot.slane %v1464, 3
    %v1485 = vrot.slane %v1465, 3
    %v1486 = vrot.slane %v1466, 3
    %v1487 = vrot.slane %v1467, 3
    %v1488 = vsel %vm516, %v1486, %v1487
    %v1489 = vsel %vm516, %v1485, %v1486
    %v1490 = vsel %vm516, %v1484, %v1485
    %v1491 = vsel %vm516, %v1487, %v1484
    %1496 = vrot.lane.b32.xlu0 %v1474, 96
    %v1497 = vpop.permute.xlu0 %1496
    %1498 = vrot.lane.b32.xlu0 %v1473, 96
    %v1499 = vpop.permute.xlu0 %1498
    %1500 = vrot.lane.b32.xlu0 %v1472, 96
    %v1501 = vpop.permute.xlu0 %1500
    %1502 = vrot.lane.b32.xlu0 %v1475, 96
    %v1503 = vpop.permute.xlu0 %1502
    %1512 = vrot.lane.b32.xlu0 %v1482, 64
    %v1513 = vpop.permute.xlu0 %1512
    %1514 = vrot.lane.b32.xlu0 %v1481, 64
    %v1515 = vpop.permute.xlu0 %1514
    %1516 = vrot.lane.b32.xlu0 %v1480, 64
    %v1517 = vpop.permute.xlu0 %1516
    %1518 = vrot.lane.b32.xlu0 %v1483, 64
    %v1519 = vpop.permute.xlu0 %1518
    %1528 = vrot.lane.b32.xlu0 %v1490, 32
    %v1529 = vpop.permute.xlu0 %1528
    %1530 = vrot.lane.b32.xlu0 %v1489, 32
    %v1531 = vpop.permute.xlu0 %1530
    %1532 = vrot.lane.b32.xlu0 %v1488, 32
    %v1533 = vpop.permute.xlu0 %1532
    %1534 = vrot.lane.b32.xlu0 %v1491, 32
    %v1535 = vpop.permute.xlu0 %1534
    %vm1540 = vcmask 785408
    %v1541 = vsel %vm1540, %v1464, %v1497
    %v1542 = vsel %vm1540, %v1465, %v1499
    %v1543 = vsel %vm1540, %v1466, %v1501
    %v1544 = vsel %vm1540, %v1467, %v1503
    %v1545 = vsel %vm655, %v1497, %v1513
    %v1546 = vsel %vm655, %v1499, %v1515
    %v1547 = vsel %vm655, %v1501, %v1517
    %v1548 = vsel %vm655, %v1503, %v1519
    %vm1549 = vcmask 261120
    %v1550 = vsel %vm1549, %v1513, %v1529
    %v1551 = vsel %vm1549, %v1515, %v1531
    %v1552 = vsel %vm1549, %v1517, %v1533
    %v1553 = vsel %vm1549, %v1519, %v1535
    %v1554 = vld [vmem:[%s9] sm:$0xff]
    %v1555 = vld [vmem:[%s9 + $0x8] sm:$0xff]
    %v1556 = vld [vmem:[%s9 + $0x10] sm:$0xff]
    %v1557 = vld [vmem:[%s9 + $0x18] sm:$0xff]
    %v1558 = vld [vmem:[%s9 + $0x20] sm:$0xff]
    %v1559 = vld [vmem:[%s9 + $0x28] sm:$0xff]
    %v1560 = vld [vmem:[%s9 + $0x30] sm:$0xff]
    %v1561 = vld [vmem:[%s9 + $0x38] sm:$0xff]
    %v1562 = vld [vmem:[%s9 + $0x40] sm:$0xff]
    %v1563 = vld [vmem:[%s9 + $0x48] sm:$0xff]
    %v1564 = vld [vmem:[%s9 + $0x50] sm:$0xff]
    %v1565 = vld [vmem:[%s9 + $0x58] sm:$0xff]
    %v1566 = vld [vmem:[%s9 + $0x60] sm:$0xff]
    %v1567 = vld [vmem:[%s9 + $0x68] sm:$0xff]
    %v1568 = vld [vmem:[%s9 + $0x70] sm:$0xff]
    %v1569 = vld [vmem:[%s9 + $0x78] sm:$0xff]
    %v1570 = vld [vmem:[%s9 + $0x80] sm:$0xff]
    %v1571 = vld [vmem:[%s9 + $0x88] sm:$0xff]
    %v1572 = vld [vmem:[%s9 + $0x90] sm:$0xff]
    %v1573 = vld [vmem:[%s9 + $0x98] sm:$0xff]
    %v1574 = vld [vmem:[%s9 + $0xa0] sm:$0xff]
    %v1575 = vld [vmem:[%s9 + $0xa8] sm:$0xff]
    %v1576 = vld [vmem:[%s9 + $0xb0] sm:$0xff]
    %v1577 = vld [vmem:[%s9 + $0xb8] sm:$0xff]
    %v1578 = vld [vmem:[%s9 + $0xc0] sm:$0xff]
    %v1579 = vld [vmem:[%s9 + $0xc8] sm:$0xff]
    %v1580 = vld [vmem:[%s9 + $0xd0] sm:$0xff]
    %v1581 = vld [vmem:[%s9 + $0xd8] sm:$0xff]
    %v1582 = vld [vmem:[%s9 + $0xe0] sm:$0xff]
    %v1583 = vld [vmem:[%s9 + $0xe8] sm:$0xff]
    %v1584 = vld [vmem:[%s9 + $0xf0] sm:$0xff]
    %v1585 = vld [vmem:[%s9 + $0xf8] sm:$0xff]
    %v1586 = vld [vmem:[%s9 + $0x100] sm:$0xff]
    %v1587 = vld [vmem:[%s9 + $0x108] sm:$0xff]
    %v1588 = vld [vmem:[%s9 + $0x110] sm:$0xff]
    %v1589 = vld [vmem:[%s9 + $0x118] sm:$0xff]
    %v1590 = vld [vmem:[%s9 + $0x120] sm:$0xff]
    %v1591 = vld [vmem:[%s9 + $0x128] sm:$0xff]
    %v1592 = vld [vmem:[%s9 + $0x130] sm:$0xff]
    %v1593 = vld [vmem:[%s9 + $0x138] sm:$0xff]
    %v1594 = vld [vmem:[%s9 + $0x140] sm:$0xff]
    %v1595 = vld [vmem:[%s9 + $0x148] sm:$0xff]
    %v1596 = vld [vmem:[%s9 + $0x150] sm:$0xff]
    %v1597 = vld [vmem:[%s9 + $0x158] sm:$0xff]
    %v1598 = vld [vmem:[%s9 + $0x160] sm:$0xff]
    %v1599 = vld [vmem:[%s9 + $0x168] sm:$0xff]
    %v1600 = vld [vmem:[%s9 + $0x170] sm:$0xff]
    %v1601 = vld [vmem:[%s9 + $0x178] sm:$0xff]
    %v1602 = vld [vmem:[%s10] sm:$0x1]
    %v1604 = vlaneseq
    %v1605 = vshrl.u32 %v1604, 7
    %v1606 = vsub.s32 0, %v1605
    %v1607 = vrot.slane %v1602, %v1606
    %1609 = vmatprep.subr.mxu0 0.0
    %1610 = vmatpush1.msra.mxu0 %v1569
    %1611 = vmatprep.subr.mxu0 0.0
    %1612 = vmatpush1.msra.mxu0 %v1568
    %1613 = vmatprep.subr.mxu0 0.0
    %1614 = vmatpush1.msra.mxu0 %v1567
    %1615 = vmatprep.subr.mxu0 0.0
    %1616 = vmatpush1.msra.mxu0 %v1566
    %1617 = vmatprep.subr.mxu0 0.0
    %1618 = vmatpush1.msra.mxu0 %v1565
    %1619 = vmatprep.subr.mxu0 0.0
    %1620 = vmatpush1.msra.mxu0 %v1564
    %1621 = vmatprep.subr.mxu0 0.0
    %1622 = vmatpush1.msra.mxu0 %v1563
    %1623 = vmatprep.subr.mxu0 0.0
    %1624 = vmatpush1.msra.mxu0 %v1562
    %1625 = vmatprep.subr.mxu0 0.0
    %1626 = vmatpush1.msra.mxu0 %v1561
    %1627 = vmatprep.subr.mxu0 0.0
    %1628 = vmatpush1.msra.mxu0 %v1560
    %1629 = vmatprep.subr.mxu0 0.0
    %1630 = vmatpush1.msra.mxu0 %v1559
    %1631 = vmatprep.subr.mxu0 0.0
    %1632 = vmatpush1.msra.mxu0 %v1558
    %1633 = vmatprep.subr.mxu0 0.0
    %1634 = vmatpush1.msra.mxu0 %v1557
    %1635 = vmatprep.subr.mxu0 0.0
    %1636 = vmatpush1.msra.mxu0 %v1556
    %1637 = vmatprep.subr.mxu0 0.0
    %1638 = vmatpush1.msra.mxu0 %v1555
    %1639 = vmatprep.subr.mxu0 0.0
    %1640 = vmatpush1.msra.mxu0 %v1554
    %1641 = vmatprep.subr.mxu0 0.0
    %1642 = vmatpush2.msra.mxu0 %v1585
    %1643 = vmatprep.subr.mxu0 0.0
    %1644 = vmatpush2.msra.mxu0 %v1584
    %1645 = vmatprep.subr.mxu0 0.0
    %1646 = vmatpush2.msra.mxu0 %v1583
    %1647 = vmatprep.subr.mxu0 0.0
    %1648 = vmatpush2.msra.mxu0 %v1582
    %1649 = vmatprep.subr.mxu0 0.0
    %1650 = vmatpush2.msra.mxu0 %v1581
    %1651 = vmatprep.subr.mxu0 0.0
    %1652 = vmatpush2.msra.mxu0 %v1580
    %1653 = vmatprep.subr.mxu0 0.0
    %1654 = vmatpush2.msra.mxu0 %v1579
    %1655 = vmatprep.subr.mxu0 0.0
    %1656 = vmatpush2.msra.mxu0 %v1578
    %1657 = vmatprep.subr.mxu0 0.0
    %1658 = vmatpush2.msra.mxu0 %v1577
    %1659 = vmatprep.subr.mxu0 0.0
    %1660 = vmatpush2.msra.mxu0 %v1576
    %1661 = vmatprep.subr.mxu0 0.0
    %1662 = vmatpush2.msra.mxu0 %v1575
    %1663 = vmatprep.subr.mxu0 0.0
    %1664 = vmatpush2.msra.mxu0 %v1574
    %1665 = vmatprep.subr.mxu0 0.0
    %1666 = vmatpush2.msra.mxu0 %v1573
    %1667 = vmatprep.subr.mxu0 0.0
    %1668 = vmatpush2.msra.mxu0 %v1572
    %1669 = vmatprep.subr.mxu0 0.0
    %1670 = vmatpush2.msra.mxu0 %v1571
    %1671 = vmatprep.subr.mxu0 0.0
    %1672 = vmatpush2.msra.mxu0 %v1570
    %1673 = vmatprep.mubr.f32.mxu0 %v1545
    %1674 = vmatmul.mubr.f32.gmra.mxu0 %v1541
    %v1675 = vpop.f32.mrf.mxu0
    %v1676 = vadd.f32 %v1607, %v1675
    %v1677 = vpop.f32.mrf.mxu0
    %1678 = vmatprep.mubr.f32.mxu0 %v1546
    %1679 = vmatmul.mubr.f32.gmra.mxu0 %v1542
    %v1680 = vpop.f32.mrf.mxu0
    %v1681 = vadd.f32 %v1607, %v1680
    %v1682 = vpop.f32.mrf.mxu0
    %1683 = vmatprep.mubr.f32.mxu0 %v1547
    %1684 = vmatmul.mubr.f32.gmra.mxu0 %v1543
    %v1685 = vpop.f32.mrf.mxu0
    %v1686 = vadd.f32 %v1607, %v1685
    %v1687 = vpop.f32.mrf.mxu0
    %1688 = vmatprep.mubr.f32.mxu0 %v1548
    %1689 = vmatmul.mubr.f32.gmra.mxu0 %v1544
    %v1690 = vpop.f32.mrf.mxu0
    %v1691 = vadd.f32 %v1607, %v1690
    %v1692 = vpop.f32.mrf.mxu0
    %1693 = vdwg.mxu0
    %1694 = vmatprep.subr.mxu0 0.0
    %1695 = vmatpush1.msra.mxu0 %v1601
    %1696 = vmatprep.subr.mxu0 0.0
    %1697 = vmatpush1.msra.mxu0 %v1600
    %1698 = vmatprep.subr.mxu0 0.0
    %1699 = vmatpush1.msra.mxu0 %v1599
    %1700 = vmatprep.subr.mxu0 0.0
    %1701 = vmatpush1.msra.mxu0 %v1598
    %1702 = vmatprep.subr.mxu0 0.0
    %1703 = vmatpush1.msra.mxu0 %v1597
    %1704 = vmatprep.subr.mxu0 0.0
    %1705 = vmatpush1.msra.mxu0 %v1596
    %1706 = vmatprep.subr.mxu0 0.0
    %1707 = vmatpush1.msra.mxu0 %v1595
    %1708 = vmatprep.subr.mxu0 0.0
    %1709 = vmatpush1.msra.mxu0 %v1594
    %1710 = vmatprep.subr.mxu0 0.0
    %1711 = vmatpush1.msra.mxu0 %v1593
    %1712 = vmatprep.subr.mxu0 0.0
    %1713 = vmatpush1.msra.mxu0 %v1592
    %1714 = vmatprep.subr.mxu0 0.0
    %1715 = vmatpush1.msra.mxu0 %v1591
    %1716 = vmatprep.subr.mxu0 0.0
    %1717 = vmatpush1.msra.mxu0 %v1590
    %1718 = vmatprep.subr.mxu0 0.0
    %1719 = vmatpush1.msra.mxu0 %v1589
    %1720 = vmatprep.subr.mxu0 0.0
    %1721 = vmatpush1.msra.mxu0 %v1588
    %1722 = vmatprep.subr.mxu0 0.0
    %1723 = vmatpush1.msra.mxu0 %v1587
    %1724 = vmatprep.subr.mxu0 0.0
    %1725 = vmatpush1.msra.mxu0 %v1586
    %1726 = vmatprep.subr.mxu0 0.0
    %1727 = vmatpush2.msra.mxu0 0.0
    %1728 = vmatprep.subr.mxu0 0.0
    %1729 = vmatpush2.msra.mxu0 0.0
    %1730 = vmatprep.subr.mxu0 0.0
    %1731 = vmatpush2.msra.mxu0 0.0
    %1732 = vmatprep.subr.mxu0 0.0
    %1733 = vmatpush2.msra.mxu0 0.0
    %1734 = vmatprep.subr.mxu0 0.0
    %1735 = vmatpush2.msra.mxu0 0.0
    %1736 = vmatprep.subr.mxu0 0.0
    %1737 = vmatpush2.msra.mxu0 0.0
    %1738 = vmatprep.subr.mxu0 0.0
    %1739 = vmatpush2.msra.mxu0 0.0
    %1740 = vmatprep.subr.mxu0 0.0
    %1741 = vmatpush2.msra.mxu0 0.0
    %1742 = vmatprep.subr.mxu0 0.0
    %1743 = vmatpush2.msra.mxu0 0.0
    %1744 = vmatprep.subr.mxu0 0.0
    %1745 = vmatpush2.msra.mxu0 0.0
    %1746 = vmatprep.subr.mxu0 0.0
    %1747 = vmatpush2.msra.mxu0 0.0
    %1748 = vmatprep.subr.mxu0 0.0
    %1749 = vmatpush2.msra.mxu0 0.0
    %1750 = vmatprep.subr.mxu0 0.0
    %1751 = vmatpush2.msra.mxu0 0.0
    %1752 = vmatprep.subr.mxu0 0.0
    %1753 = vmatpush2.msra.mxu0 0.0
    %1754 = vmatprep.subr.mxu0 0.0
    %1755 = vmatpush2.msra.mxu0 0.0
    %1756 = vmatprep.subr.mxu0 0.0
    %1757 = vmatpush2.msra.mxu0 0.0
    %1758 = vmatprep.mubr.f32.mxu0 0.0
    %1759 = vmatmul.mubr.f32.gmra.mxu0 %v1550
    %v1760 = vpop.f32.mrf.mxu0
    %v1761 = vadd.f32 %v1676, %v1760
    %v1762 = vpop.f32.mrf.mxu0
    %1763 = vmatprep.mubr.f32.mxu0 0.0
    %1764 = vmatmul.mubr.f32.gmra.mxu0 %v1551
    %v1765 = vpop.f32.mrf.mxu0
    %v1766 = vadd.f32 %v1681, %v1765
    %v1767 = vpop.f32.mrf.mxu0
    %1768 = vmatprep.mubr.f32.mxu0 0.0
    %1769 = vmatmul.mubr.f32.gmra.mxu0 %v1552
    %v1770 = vpop.f32.mrf.mxu0
    %v1771 = vadd.f32 %v1686, %v1770
    %v1772 = vpop.f32.mrf.mxu0
    %1773 = vmatprep.mubr.f32.mxu0 0.0
    %1774 = vmatmul.mubr.f32.gmra.mxu0 %v1553
    %v1775 = vpop.f32.mrf.mxu0
    %v1776 = vadd.f32 %v1691, %v1775
    %v1777 = vpop.f32.mrf.mxu0
    %1778 = vdwg.mxu0
    %v1779 = vmul.f32 %v1761, 0.01
    %v1780 = vmul.f32 %v1766, 0.01
    %v1781 = vmul.f32 %v1771, 0.01
    %v1782 = vmul.f32 %v1776, 0.01
    %v1783 = vmax.f32 %v1761, %v1779
    %v1784 = vmax.f32 %v1766, %v1780
    %v1785 = vmax.f32 %v1771, %v1781
    %v1786 = vmax.f32 %v1776, %v1782
    %v1787 = vrot.slane %v1783, 1
    %v1788 = vrot.slane %v1784, 1
    %v1789 = vrot.slane %v1785, 1
    %v1790 = vrot.slane %v1786, 1
    %v1791 = vsel %vm329, %v1789, %v1790
    %v1792 = vsel %vm329, %v1788, %v1789
    %v1793 = vsel %vm329, %v1787, %v1788
    %v1794 = vsel %vm329, %v1790, %v1787
    %v1795 = vrot.slane %v1783, 2
    %v1796 = vrot.slane %v1784, 2
    %v1797 = vrot.slane %v1785, 2
    %v1798 = vrot.slane %v1786, 2
    %v1799 = vsel %vm499, %v1797, %v1798
    %v1800 = vsel %vm499, %v1796, %v1797
    %v1801 = vsel %vm499, %v1795, %v1796
    %v1802 = vsel %vm499, %v1798, %v1795
    %v1803 = vrot.slane %v1783, 3
    %v1804 = vrot.slane %v1784, 3
    %v1805 = vrot.slane %v1785, 3
    %v1806 = vrot.slane %v1786, 3
    %v1807 = vsel %vm516, %v1805, %v1806
    %v1808 = vsel %vm516, %v1804, %v1805
    %v1809 = vsel %vm516, %v1803, %v1804
    %v1810 = vsel %vm516, %v1806, %v1803
    %v1811 = vrot.slane %v1783, 4
    %v1812 = vrot.slane %v1784, 4
    %v1813 = vrot.slane %v1785, 4
    %v1814 = vrot.slane %v1786, 4
    %v1815 = vsel %vm533, %v1813, %v1814
    %v1816 = vsel %vm533, %v1812, %v1813
    %v1817 = vsel %vm533, %v1811, %v1812
    %v1818 = vsel %vm533, %v1814, %v1811
    %1823 = vrot.lane.b32.xlu0 %v1793, 64
    %v1824 = vpop.permute.xlu0 %1823
    %1825 = vrot.lane.b32.xlu0 %v1792, 64
    %v1826 = vpop.permute.xlu0 %1825
    %1827 = vrot.lane.b32.xlu0 %v1791, 64
    %v1828 = vpop.permute.xlu0 %1827
    %1829 = vrot.lane.b32.xlu0 %v1794, 64
    %v1830 = vpop.permute.xlu0 %1829
    %1839 = vrot.lane.b32.xlu0 %v1809, 64
    %v1840 = vpop.permute.xlu0 %1839
    %1841 = vrot.lane.b32.xlu0 %v1808, 64
    %v1842 = vpop.permute.xlu0 %1841
    %1843 = vrot.lane.b32.xlu0 %v1807, 64
    %v1844 = vpop.permute.xlu0 %1843
    %1845 = vrot.lane.b32.xlu0 %v1810, 64
    %v1846 = vpop.permute.xlu0 %1845
    %v1851 = vsel %vm655, %v1783, %v1824
    %v1852 = vsel %vm655, %v1784, %v1826
    %v1853 = vsel %vm655, %v1785, %v1828
    %v1854 = vsel %vm655, %v1786, %v1830
    %v1855 = vsel %vm655, %v1801, %v1840
    %v1856 = vsel %vm655, %v1800, %v1842
    %v1857 = vsel %vm655, %v1799, %v1844
    %v1858 = vsel %vm655, %v1802, %v1846
    %v1859 = vld [vmem:[%s11] sm:$0x3]
    %v1861 = vsel %vm1549, %v1859, 0
    %1863 = vmatprep.subr.mxu0 0.0
    %1864 = vmatpush1.msra.mxu0 0.0
    %1865 = vmatprep.subr.mxu0 0.0
    %1866 = vmatpush1.msra.mxu0 0.0
    %1867 = vmatprep.subr.mxu0 0.0
    %1868 = vmatpush1.msra.mxu0 0.0
    %1869 = vmatprep.subr.mxu0 0.0
    %1870 = vmatpush1.msra.mxu0 0.0
    %1871 = vmatprep.subr.mxu0 0.0
    %1872 = vmatpush1.msra.mxu0 0.0
    %1873 = vmatprep.subr.mxu0 0.0
    %1874 = vmatpush1.msra.mxu0 0.0
    %1875 = vmatprep.subr.mxu0 0.0
    %1876 = vmatpush1.msra.mxu0 0.0
    %1877 = vmatprep.subr.mxu0 0.0
    %1878 = vmatpush1.msra.mxu0 0.0
    %1879 = vmatprep.subr.mxu0 0.0
    %1880 = vmatpush1.msra.mxu0 0.0
    %1881 = vmatprep.subr.mxu0 0.0
    %1882 = vmatpush1.msra.mxu0 0.0
    %1883 = vmatprep.subr.mxu0 0.0
    %1884 = vmatpush1.msra.mxu0 0.0
    %1885 = vmatprep.subr.mxu0 0.0
    %1886 = vmatpush1.msra.mxu0 0.0
    %1887 = vmatprep.subr.mxu0 %v1858
    %1888 = vmatpush1.msra.mxu0 %v1854
    %1889 = vmatprep.subr.mxu0 %v1857
    %1890 = vmatpush1.msra.mxu0 %v1853
    %1891 = vmatprep.subr.mxu0 %v1856
    %1892 = vmatpush1.msra.mxu0 %v1852
    %1893 = vmatprep.subr.mxu0 %v1855
    %1894 = vmatpush1.msra.mxu0 %v1851
    %1895 = vmatprep.subr.mxu0 0.0
    %1896 = vmatpush2.msra.mxu0 0.0
    %1897 = vmatprep.subr.mxu0 0.0
    %1898 = vmatpush2.msra.mxu0 0.0
    %1899 = vmatprep.subr.mxu0 0.0
    %1900 = vmatpush2.msra.mxu0 0.0
    %1901 = vmatprep.subr.mxu0 0.0
    %1902 = vmatpush2.msra.mxu0 0.0
    %1903 = vmatprep.subr.mxu0 0.0
    %1904 = vmatpush2.msra.mxu0 0.0
    %1905 = vmatprep.subr.mxu0 0.0
    %1906 = vmatpush2.msra.mxu0 0.0
    %1907 = vmatprep.subr.mxu0 0.0
    %1908 = vmatpush2.msra.mxu0 0.0
    %1909 = vmatprep.subr.mxu0 0.0
    %1910 = vmatpush2.msra.mxu0 0.0
    %1911 = vmatprep.subr.mxu0 0.0
    %1912 = vmatpush2.msra.mxu0 0.0
    %1913 = vmatprep.subr.mxu0 0.0
    %1914 = vmatpush2.msra.mxu0 0.0
    %1915 = vmatprep.subr.mxu0 0.0
    %1916 = vmatpush2.msra.mxu0 0.0
    %1917 = vmatprep.subr.mxu0 0.0
    %1918 = vmatpush2.msra.mxu0 0.0
    %1919 = vmatprep.subr.mxu0 0.0
    %1920 = vmatpush2.msra.mxu0 0.0
    %1921 = vmatprep.subr.mxu0 0.0
    %1922 = vmatpush2.msra.mxu0 0.0
    %1923 = vmatprep.subr.mxu0 0.0
    %1924 = vmatpush2.msra.mxu0 0.0
    %1925 = vmatprep.subr.mxu0 0.0
    %1926 = vmatpush2.msra.mxu0 0.0
    %1927 = vmatprep.mubr.f32.mxu0 0.0
    %1928 = vmatmul.mubr.f32.gmra.mxu0 %v1861
    %v1929 = vpop.f32.mrf.mxu0
    %v1930 = vadd.f32 0.0, %v1929
    %v1931 = vpop.f32.mrf.mxu0
    %v1932 = vadd.f32 0.0, %v1931
    %1933 = vdwg.mxu0
    %1934 = vmatprep.subr.mxu0 0.0
    %1935 = vmatpush1.msra.mxu0 0.0
    %1936 = vmatprep.subr.mxu0 0.0
    %1937 = vmatpush1.msra.mxu0 0.0
    %1938 = vmatprep.subr.mxu0 0.0
    %1939 = vmatpush1.msra.mxu0 0.0
    %1940 = vmatprep.subr.mxu0 0.0
    %1941 = vmatpush1.msra.mxu0 0.0
    %1942 = vmatprep.subr.mxu0 0.0
    %1943 = vmatpush1.msra.mxu0 0.0
    %1944 = vmatprep.subr.mxu0 0.0
    %1945 = vmatpush1.msra.mxu0 0.0
    %1946 = vmatprep.subr.mxu0 0.0
    %1947 = vmatpush1.msra.mxu0 0.0
    %1948 = vmatprep.subr.mxu0 0.0
    %1949 = vmatpush1.msra.mxu0 0.0
    %1950 = vmatprep.subr.mxu0 0.0
    %1951 = vmatpush1.msra.mxu0 0.0
    %1952 = vmatprep.subr.mxu0 0.0
    %1953 = vmatpush1.msra.mxu0 0.0
    %1954 = vmatprep.subr.mxu0 0.0
    %1955 = vmatpush1.msra.mxu0 0.0
    %1956 = vmatprep.subr.mxu0 0.0
    %1957 = vmatpush1.msra.mxu0 0.0
    %1958 = vmatprep.subr.mxu0 0.0
    %1959 = vmatpush1.msra.mxu0 %v1818
    %1960 = vmatprep.subr.mxu0 0.0
    %1961 = vmatpush1.msra.mxu0 %v1815
    %1962 = vmatprep.subr.mxu0 0.0
    %1963 = vmatpush1.msra.mxu0 %v1816
    %1964 = vmatprep.subr.mxu0 0.0
    %1965 = vmatpush1.msra.mxu0 %v1817
    %1966 = vmatprep.subr.mxu0 0.0
    %1967 = vmatpush2.msra.mxu0 0.0
    %1968 = vmatprep.subr.mxu0 0.0
    %1969 = vmatpush2.msra.mxu0 0.0
    %1970 = vmatprep.subr.mxu0 0.0
    %1971 = vmatpush2.msra.mxu0 0.0
    %1972 = vmatprep.subr.mxu0 0.0
    %1973 = vmatpush2.msra.mxu0 0.0
    %1974 = vmatprep.subr.mxu0 0.0
    %1975 = vmatpush2.msra.mxu0 0.0
    %1976 = vmatprep.subr.mxu0 0.0
    %1977 = vmatpush2.msra.mxu0 0.0
    %1978 = vmatprep.subr.mxu0 0.0
    %1979 = vmatpush2.msra.mxu0 0.0
    %1980 = vmatprep.subr.mxu0 0.0
    %1981 = vmatpush2.msra.mxu0 0.0
    %1982 = vmatprep.subr.mxu0 0.0
    %1983 = vmatpush2.msra.mxu0 0.0
    %1984 = vmatprep.subr.mxu0 0.0
    %1985 = vmatpush2.msra.mxu0 0.0
    %1986 = vmatprep.subr.mxu0 0.0
    %1987 = vmatpush2.msra.mxu0 0.0
    %1988 = vmatprep.subr.mxu0 0.0
    %1989 = vmatpush2.msra.mxu0 0.0
    %1990 = vmatprep.subr.mxu0 0.0
    %1991 = vmatpush2.msra.mxu0 0.0
    %1992 = vmatprep.subr.mxu0 0.0
    %1993 = vmatpush2.msra.mxu0 0.0
    %1994 = vmatprep.subr.mxu0 0.0
    %1995 = vmatpush2.msra.mxu0 0.0
    %1996 = vmatprep.subr.mxu0 0.0
    %1997 = vmatpush2.msra.mxu0 0.0
    %1998 = vmatprep.mubr.f32.mxu0 0.0
    %1999 = vmatmul.mubr.f32.gmra.mxu0 %v1861
    %v2000 = vpop.f32.mrf.mxu0
    %v2001 = vadd.f32 0.0, %v2000
    %v2002 = vpop.f32.mrf.mxu0
    %2003 = vdwg.mxu0
    %v2004 = vld [vmem:[%s12] sm:$0xff]
    %v2005 = vld [vmem:[%s12 + $0x8] sm:$0xff]
    %v2006 = vld [vmem:[%s12 + $0x10] sm:$0xff]
    %v2007 = vld [vmem:[%s12 + $0x18] sm:$0xff]
    %v2008 = vld [vmem:[%s12 + $0x20] sm:$0xff]
    %v2009 = vld [vmem:[%s12 + $0x28] sm:$0xff]
    %v2010 = vld [vmem:[%s12 + $0x30] sm:$0xff]
    %v2011 = vld [vmem:[%s12 + $0x38] sm:$0xff]
    %v2012 = vld [vmem:[%s12 + $0x40] sm:$0xff]
    %v2013 = vld [vmem:[%s12 + $0x48] sm:$0xff]
    %v2014 = vld [vmem:[%s12 + $0x50] sm:$0xff]
    %v2015 = vld [vmem:[%s12 + $0x58] sm:$0xff]
    %v2016 = vld [vmem:[%s12 + $0x60] sm:$0xff]
    %v2017 = vld [vmem:[%s12 + $0x68] sm:$0xff]
    %v2018 = vld [vmem:[%s12 + $0x70] sm:$0xff]
    %v2019 = vld [vmem:[%s12 + $0x78] sm:$0xff]
    %v2020 = vld [vmem:[%s12 + $0x80] sm:$0xff]
    %v2021 = vld [vmem:[%s12 + $0x88] sm:$0xff]
    %v2022 = vld [vmem:[%s12 + $0x90] sm:$0xff]
    %v2023 = vld [vmem:[%s12 + $0x98] sm:$0xff]
    %v2024 = vld [vmem:[%s12 + $0xa0] sm:$0xff]
    %v2025 = vld [vmem:[%s12 + $0xa8] sm:$0xff]
    %v2026 = vld [vmem:[%s12 + $0xb0] sm:$0xff]
    %v2027 = vld [vmem:[%s12 + $0xb8] sm:$0xff]
    %v2028 = vld [vmem:[%s12 + $0xc0] sm:$0xff]
    %v2029 = vld [vmem:[%s12 + $0xc8] sm:$0xff]
    %v2030 = vld [vmem:[%s12 + $0xd0] sm:$0xff]
    %v2031 = vld [vmem:[%s12 + $0xd8] sm:$0xff]
    %v2032 = vld [vmem:[%s12 + $0xe0] sm:$0xff]
    %v2033 = vld [vmem:[%s12 + $0xe8] sm:$0xff]
    %v2034 = vld [vmem:[%s12 + $0xf0] sm:$0xff]
    %v2035 = vld [vmem:[%s12 + $0xf8] sm:$0xff]
    %v2036 = vld [vmem:[%s12 + $0x100] sm:$0xff]
    %v2037 = vld [vmem:[%s12 + $0x108] sm:$0xff]
    %v2038 = vld [vmem:[%s12 + $0x110] sm:$0xff]
    %v2039 = vld [vmem:[%s12 + $0x118] sm:$0xff]
    %v2040 = vld [vmem:[%s12 + $0x120] sm:$0xff]
    %v2041 = vld [vmem:[%s12 + $0x128] sm:$0xff]
    %v2042 = vld [vmem:[%s12 + $0x130] sm:$0xff]
    %v2043 = vld [vmem:[%s12 + $0x138] sm:$0xff]
    %v2044 = vld [vmem:[%s13] sm:$0x1]
    %v2046 = vlaneseq
    %v2047 = vshrl.u32 %v2046, 7
    %v2048 = vsub.s32 0, %v2047
    %v2049 = vrot.slane %v2044, %v2048
    %v2052 = vsel %vm655, %v2001, 0
    %2054 = vmatprep.subr.mxu0 0.0
    %2055 = vmatpush1.msra.mxu0 %v2019
    %2056 = vmatprep.subr.mxu0 0.0
    %2057 = vmatpush1.msra.mxu0 %v2018
    %2058 = vmatprep.subr.mxu0 0.0
    %2059 = vmatpush1.msra.mxu0 %v2017
    %2060 = vmatprep.subr.mxu0 0.0
    %2061 = vmatpush1.msra.mxu0 %v2016
    %2062 = vmatprep.subr.mxu0 0.0
    %2063 = vmatpush1.msra.mxu0 %v2015
    %2064 = vmatprep.subr.mxu0 0.0
    %2065 = vmatpush1.msra.mxu0 %v2014
    %2066 = vmatprep.subr.mxu0 0.0
    %2067 = vmatpush1.msra.mxu0 %v2013
    %2068 = vmatprep.subr.mxu0 0.0
    %2069 = vmatpush1.msra.mxu0 %v2012
    %2070 = vmatprep.subr.mxu0 0.0
    %2071 = vmatpush1.msra.mxu0 %v2011
    %2072 = vmatprep.subr.mxu0 0.0
    %2073 = vmatpush1.msra.mxu0 %v2010
    %2074 = vmatprep.subr.mxu0 0.0
    %2075 = vmatpush1.msra.mxu0 %v2009
    %2076 = vmatprep.subr.mxu0 0.0
    %2077 = vmatpush1.msra.mxu0 %v2008
    %2078 = vmatprep.subr.mxu0 0.0
    %2079 = vmatpush1.msra.mxu0 %v2007
    %2080 = vmatprep.subr.mxu0 0.0
    %2081 = vmatpush1.msra.mxu0 %v2006
    %2082 = vmatprep.subr.mxu0 0.0
    %2083 = vmatpush1.msra.mxu0 %v2005
    %2084 = vmatprep.subr.mxu0 0.0
    %2085 = vmatpush1.msra.mxu0 %v2004
    %2086 = vmatprep.subr.mxu0 0.0
    %2087 = vmatpush2.msra.mxu0 %v2035
    %2088 = vmatprep.subr.mxu0 0.0
    %2089 = vmatpush2.msra.mxu0 %v2034
    %2090 = vmatprep.subr.mxu0 0.0
    %2091 = vmatpush2.msra.mxu0 %v2033
    %2092 = vmatprep.subr.mxu0 0.0
    %2093 = vmatpush2.msra.mxu0 %v2032
    %2094 = vmatprep.subr.mxu0 0.0
    %2095 = vmatpush2.msra.mxu0 %v2031
    %2096 = vmatprep.subr.mxu0 0.0
    %2097 = vmatpush2.msra.mxu0 %v2030
    %2098 = vmatprep.subr.mxu0 0.0
    %2099 = vmatpush2.msra.mxu0 %v2029
    %2100 = vmatprep.subr.mxu0 0.0
    %2101 = vmatpush2.msra.mxu0 %v2028
    %2102 = vmatprep.subr.mxu0 0.0
    %2103 = vmatpush2.msra.mxu0 %v2027
    %2104 = vmatprep.subr.mxu0 0.0
    %2105 = vmatpush2.msra.mxu0 %v2026
    %2106 = vmatprep.subr.mxu0 0.0
    %2107 = vmatpush2.msra.mxu0 %v2025
    %2108 = vmatprep.subr.mxu0 0.0
    %2109 = vmatpush2.msra.mxu0 %v2024
    %2110 = vmatprep.subr.mxu0 0.0
    %2111 = vmatpush2.msra.mxu0 %v2023
    %2112 = vmatprep.subr.mxu0 0.0
    %2113 = vmatpush2.msra.mxu0 %v2022
    %2114 = vmatprep.subr.mxu0 0.0
    %2115 = vmatpush2.msra.mxu0 %v2021
    %2116 = vmatprep.subr.mxu0 0.0
    %2117 = vmatpush2.msra.mxu0 %v2020
    %2118 = vmatprep.mubr.f32.mxu0 %v1932
    %2119 = vmatmul.mubr.f32.gmra.mxu0 %v1930
    %v2120 = vpop.f32.mrf.mxu0
    %v2121 = vadd.f32 %v2049, %v2120
    %v2122 = vpop.f32.mrf.mxu0
    %2123 = vdwg.mxu0
    %2124 = vmatprep.subr.mxu0 0.0
    %2125 = vmatpush1.msra.mxu0 0.0
    %2126 = vmatprep.subr.mxu0 0.0
    %2127 = vmatpush1.msra.mxu0 0.0
    %2128 = vmatprep.subr.mxu0 0.0
    %2129 = vmatpush1.msra.mxu0 0.0
    %2130 = vmatprep.subr.mxu0 0.0
    %2131 = vmatpush1.msra.mxu0 0.0
    %2132 = vmatprep.subr.mxu0 0.0
    %2133 = vmatpush1.msra.mxu0 0.0
    %2134 = vmatprep.subr.mxu0 0.0
    %2135 = vmatpush1.msra.mxu0 0.0
    %2136 = vmatprep.subr.mxu0 0.0
    %2137 = vmatpush1.msra.mxu0 0.0
    %2138 = vmatprep.subr.mxu0 0.0
    %2139 = vmatpush1.msra.mxu0 0.0
    %2140 = vmatprep.subr.mxu0 0.0
    %2141 = vmatpush1.msra.mxu0 %v2043
    %2142 = vmatprep.subr.mxu0 0.0
    %2143 = vmatpush1.msra.mxu0 %v2042
    %2144 = vmatprep.subr.mxu0 0.0
    %2145 = vmatpush1.msra.mxu0 %v2041
    %2146 = vmatprep.subr.mxu0 0.0
    %2147 = vmatpush1.msra.mxu0 %v2040
    %2148 = vmatprep.subr.mxu0 0.0
    %2149 = vmatpush1.msra.mxu0 %v2039
    %2150 = vmatprep.subr.mxu0 0.0
    %2151 = vmatpush1.msra.mxu0 %v2038
    %2152 = vmatprep.subr.mxu0 0.0
    %2153 = vmatpush1.msra.mxu0 %v2037
    %2154 = vmatprep.subr.mxu0 0.0
    %2155 = vmatpush1.msra.mxu0 %v2036
    %2156 = vmatprep.subr.mxu0 0.0
    %2157 = vmatpush2.msra.mxu0 0.0
    %2158 = vmatprep.subr.mxu0 0.0
    %2159 = vmatpush2.msra.mxu0 0.0
    %2160 = vmatprep.subr.mxu0 0.0
    %2161 = vmatpush2.msra.mxu0 0.0
    %2162 = vmatprep.subr.mxu0 0.0
    %2163 = vmatpush2.msra.mxu0 0.0
    %2164 = vmatprep.subr.mxu0 0.0
    %2165 = vmatpush2.msra.mxu0 0.0
    %2166 = vmatprep.subr.mxu0 0.0
    %2167 = vmatpush2.msra.mxu0 0.0
    %2168 = vmatprep.subr.mxu0 0.0
    %2169 = vmatpush2.msra.mxu0 0.0
    %2170 = vmatprep.subr.mxu0 0.0
    %2171 = vmatpush2.msra.mxu0 0.0
    %2172 = vmatprep.subr.mxu0 0.0
    %2173 = vmatpush2.msra.mxu0 0.0
    %2174 = vmatprep.subr.mxu0 0.0
    %2175 = vmatpush2.msra.mxu0 0.0
    %2176 = vmatprep.subr.mxu0 0.0
    %2177 = vmatpush2.msra.mxu0 0.0
    %2178 = vmatprep.subr.mxu0 0.0
    %2179 = vmatpush2.msra.mxu0 0.0
    %2180 = vmatprep.subr.mxu0 0.0
    %2181 = vmatpush2.msra.mxu0 0.0
    %2182 = vmatprep.subr.mxu0 0.0
    %2183 = vmatpush2.msra.mxu0 0.0
    %2184 = vmatprep.subr.mxu0 0.0
    %2185 = vmatpush2.msra.mxu0 0.0
    %2186 = vmatprep.subr.mxu0 0.0
    %2187 = vmatpush2.msra.mxu0 0.0
    %2188 = vmatprep.mubr.f32.mxu0 0.0
    %2189 = vmatmul.mubr.f32.gmra.mxu0 %v2052
    %v2190 = vpop.f32.mrf.mxu0
    %v2191 = vadd.f32 %v2121, %v2190
    %v2192 = vpop.f32.mrf.mxu0
    %2193 = vdwg.mxu0
    %v2194 = vld [vmem:[%s14] sm:$0xff]
    %v2195 = vld [vmem:[%s14 + $0x8] sm:$0xff]
    %v2196 = vld [vmem:[%s14 + $0x10] sm:$0xff]
    %v2197 = vld [vmem:[%s14 + $0x18] sm:$0xff]
    %v2198 = vld [vmem:[%s14 + $0x20] sm:$0xff]
    %v2199 = vld [vmem:[%s14 + $0x28] sm:$0xff]
    %v2200 = vld [vmem:[%s14 + $0x30] sm:$0xff]
    %v2201 = vld [vmem:[%s14 + $0x38] sm:$0xff]
    %v2202 = vld [vmem:[%s14 + $0x40] sm:$0xff]
    %v2203 = vld [vmem:[%s14 + $0x48] sm:$0xff]
    %v2204 = vld [vmem:[%s14 + $0x50] sm:$0xff]
    %v2205 = vld [vmem:[%s14 + $0x58] sm:$0xff]
    %v2206 = vld [vmem:[%s14 + $0x60] sm:$0xff]
    %v2207 = vld [vmem:[%s14 + $0x68] sm:$0xff]
    %v2208 = vld [vmem:[%s14 + $0x70] sm:$0xff]
    %v2209 = vld [vmem:[%s14 + $0x78] sm:$0xff]
    %v2210 = vld [vmem:[%s15] sm:$0x1]
    %v2212 = vlaneseq
    %v2213 = vshrl.u32 %v2212, 7
    %v2214 = vsub.s32 0, %v2213
    %v2215 = vrot.slane %v2210, %v2214
    %2217 = vmatprep.subr.mxu0 0.0
    %2218 = vmatpush1.msra.mxu0 %v2209
    %2219 = vmatprep.subr.mxu0 0.0
    %2220 = vmatpush1.msra.mxu0 %v2208
    %2221 = vmatprep.subr.mxu0 0.0
    %2222 = vmatpush1.msra.mxu0 %v2207
    %2223 = vmatprep.subr.mxu0 0.0
    %2224 = vmatpush1.msra.mxu0 %v2206
    %2225 = vmatprep.subr.mxu0 0.0
    %2226 = vmatpush1.msra.mxu0 %v2205
    %2227 = vmatprep.subr.mxu0 0.0
    %2228 = vmatpush1.msra.mxu0 %v2204
    %2229 = vmatprep.subr.mxu0 0.0
    %2230 = vmatpush1.msra.mxu0 %v2203
    %2231 = vmatprep.subr.mxu0 0.0
    %2232 = vmatpush1.msra.mxu0 %v2202
    %2233 = vmatprep.subr.mxu0 0.0
    %2234 = vmatpush1.msra.mxu0 %v2201
    %2235 = vmatprep.subr.mxu0 0.0
    %2236 = vmatpush1.msra.mxu0 %v2200
    %2237 = vmatprep.subr.mxu0 0.0
    %2238 = vmatpush1.msra.mxu0 %v2199
    %2239 = vmatprep.subr.mxu0 0.0
    %2240 = vmatpush1.msra.mxu0 %v2198
    %2241 = vmatprep.subr.mxu0 0.0
    %2242 = vmatpush1.msra.mxu0 %v2197
    %2243 = vmatprep.subr.mxu0 0.0
    %2244 = vmatpush1.msra.mxu0 %v2196
    %2245 = vmatprep.subr.mxu0 0.0
    %2246 = vmatpush1.msra.mxu0 %v2195
    %2247 = vmatprep.subr.mxu0 0.0
    %2248 = vmatpush1.msra.mxu0 %v2194
    %2249 = vmatprep.subr.mxu0 0.0
    %2250 = vmatpush2.msra.mxu0 0.0
    %2251 = vmatprep.subr.mxu0 0.0
    %2252 = vmatpush2.msra.mxu0 0.0
    %2253 = vmatprep.subr.mxu0 0.0
    %2254 = vmatpush2.msra.mxu0 0.0
    %2255 = vmatprep.subr.mxu0 0.0
    %2256 = vmatpush2.msra.mxu0 0.0
    %2257 = vmatprep.subr.mxu0 0.0
    %2258 = vmatpush2.msra.mxu0 0.0
    %2259 = vmatprep.subr.mxu0 0.0
    %2260 = vmatpush2.msra.mxu0 0.0
    %2261 = vmatprep.subr.mxu0 0.0
    %2262 = vmatpush2.msra.mxu0 0.0
    %2263 = vmatprep.subr.mxu0 0.0
    %2264 = vmatpush2.msra.mxu0 0.0
    %2265 = vmatprep.subr.mxu0 0.0
    %2266 = vmatpush2.msra.mxu0 0.0
    %2267 = vmatprep.subr.mxu0 0.0
    %2268 = vmatpush2.msra.mxu0 0.0
    %2269 = vmatprep.subr.mxu0 0.0
    %2270 = vmatpush2.msra.mxu0 0.0
    %2271 = vmatprep.subr.mxu0 0.0
    %2272 = vmatpush2.msra.mxu0 0.0
    %2273 = vmatprep.subr.mxu0 0.0
    %2274 = vmatpush2.msra.mxu0 0.0
    %2275 = vmatprep.subr.mxu0 0.0
    %2276 = vmatpush2.msra.mxu0 0.0
    %2277 = vmatprep.subr.mxu0 0.0
    %2278 = vmatpush2.msra.mxu0 0.0
    %2279 = vmatprep.subr.mxu0 0.0
    %2280 = vmatpush2.msra.mxu0 0.0
    %2281 = vmatprep.mubr.f32.mxu0 0.0
    %2282 = vmatmul.mubr.f32.gmra.mxu0 %v2191
    %v2283 = vpop.f32.mrf.mxu0
    %v2284 = vadd.f32 %v2215, %v2283
    %v2285 = vpop.f32.mrf.mxu0
    %2286 = vdwg.mxu0
    %vm2287 = vcmask 517120
    %2288 = vst.msk [vmem:[#allocation2] sm:$0x3] %vm2287, %v2284
    // Predicated region
    $region66: #{protein_feature_cnn_forward.1} parent=1 // pred_check
      _
    $region67: #{protein_feature_cnn_forward.1} parent=1 // pred_check_branch
      %2290 = sbr.rel (0) target = $region69
    $region68: #{protein_feature_cnn_forward.1} parent=1 // pred_region
      %s2292 = ssub.s32 32, 32
      %2293 = vsyncadd [#allocation3], %s2292
      %s2295 = sshll.u32 [#allocation2], 4
      %s2296 = int_to_ptr.vmem [resolvable:$true] %s2295
      %2298 = dma.vmem_to_hbm [thread:$0]  %s2296, 32, %s16, [#allocation3]
    $region69: #{protein_feature_cnn_forward.1} parent=1 // pred_fallthru
      _
    // Predicated region
    $region70: #{protein_feature_cnn_forward.1} parent=1 // pred_check
      _
    $region71: #{protein_feature_cnn_forward.1} parent=1 // pred_check_branch
      %2300 = sbr.rel (0) target = $region73
    $region72: #{protein_feature_cnn_forward.1} parent=1 // pred_region
      %2301 = dma.done [#allocation3], 32
    $region73: #{protein_feature_cnn_forward.1} parent=1 // pred_fallthru
      _
    %2302 = vsyncpa [#allocation3], 1

</llo_original>
